<compile_context>
chip_gen: v5e
topology: v5e:2x2
jax: 0.10.0
libtpu: 0.0.40
codegen_flags: <defaults>
</compile_context>

<pallas_src>
import functools

import jax
import jax.numpy as jnp
from jax.experimental import pallas as pl
from jax.experimental.pallas import tpu as pltpu


def extend_head_kernel(r_ref, xt_ref, act_ref, wstack_ref, bias_ref,
                       out_ref, acc_ref, *, hidden_dim, head_dim):
    n = pl.program_id(1)

    @pl.when(n == 0)
    def _init():
        acc_ref[...] = jnp.zeros_like(acc_ref)

    # Fused masked-sum / empty-route-mean reduction for this node tile.
    # x block is (tile_b, H, tile_n): node axis is lane-dense; the reducer block
    # (tile_b, 1, tile_n) broadcasts over the H sublanes.  bf16 * f32 promotes
    # to f32 and the lane reduce accumulates in f32 (VPU + XLU; MXU stays idle
    # for the stream, which is the mem-bound part).
    acc_ref[...] += jnp.sum(xt_ref[...] * r_ref[...], axis=-1)

    @pl.when(n == pl.num_programs(1) - 1)
    def _finalize():
        H, D = hidden_dim, head_dim
        # Statically sliced, sublane-aligned views into the packed weight stack.
        w_ra1 = wstack_ref[0:H, :]                       # route_aggregator L1
        w_rc = wstack_ref[H:H + D, :]                    # ra_w2 @ as_w1r (folded)
        w_a1 = wstack_ref[H + D:2 * H + D, :]            # scorer L1, action half
        w_2 = wstack_ref[2 * H + D:2 * H + 2 * D, :]     # scorer L2
        b_ra1 = bias_ref[0:1, :]
        b_rc = bias_ref[1:2, :]                          # ra_b2 @ as_w1r + as_b1
        b_2 = bias_ref[2:3, :]
        w3 = bias_ref[3:4, :]                            # scorer L3 weight / T
        b3 = bias_ref[4:5, 0:1]                          # scorer L3 bias / T

        route_summary = acc_ref[...]                     # [tb, H] f32
        h_ra = jnp.maximum(
            jnp.dot(route_summary, w_ra1,
                    preferred_element_type=jnp.float32) + b_ra1, 0.0)
        route_ctx = jnp.dot(h_ra, w_rc,
                            preferred_element_type=jnp.float32) + b_rc   # [tb, D]

        act = act_ref[...].astype(jnp.float32)
        tb, na, _ = act_ref.shape
        a_ctx = jnp.dot(act.reshape(tb * na, H), w_a1,
                        preferred_element_type=jnp.float32).reshape(tb, na, D)
        # Dropout(0.1) layers are identity in eval/inference mode.
        h1 = jnp.maximum(a_ctx + route_ctx[:, None, :], 0.0)             # [tb,A,D]
        h2 = jnp.maximum(
            jnp.dot(h1.reshape(tb * na, D), w_2,
                    preferred_element_type=jnp.float32).reshape(tb, na, D)
            + b_2, 0.0)
        scores = jnp.sum(h2 * w3, axis=-1) + b3                          # [tb, A]
        # TODO(synk): A=8 makes this a masked partial store; it fires once per
        # batch tile so it is cheap — pad A to 128 lanes if num_actions grows.
        out_ref[...] = scores.astype(out_ref.dtype)


def _pad_up(v, m):
    return ((v + m - 1) // m) * m


def _vmem_tile_bytes(shape, itemsize):
    s = list(shape)
    s[-1] = _pad_up(s[-1], 128)
    if len(s) >= 2:
        s[-2] = _pad_up(s[-2], 8)
    n = 1
    for d in s:
        n *= d
    return n * itemsize


def _physical_vmem_bytes():
    try:
        return int(pltpu.get_tpu_info().vmem_capacity_bytes)
    except Exception:
        return 64 * 1024 * 1024   # conservative (v7x-sized) fallback


def _pick_tile_b(batch, requested):
    """Largest multiple-of-8 divisor of `batch` <= requested; when batch >= 16
    prefer >= 2 batch tiles (feeds v7x's two TensorCores via the 'parallel'
    axis).  Falls back to the full batch (block == full dim is layout-legal)."""
    cap = min(requested, batch // 2) if batch >= 16 else min(requested, batch)
    best = batch
    t = 8
    while t <= cap:
        if batch % t == 0:
            best = t
        t += 8
    return best


@functools.partial(jax.jit, static_argnames=("tile_b", "tile_n", "stream_dtype"))
def extend_head_forward(node_embeddings, route_mask, action_features, params,
                        *, tile_b=32, tile_n=1024, stream_dtype=jnp.bfloat16):
    B, N, H = node_embeddings.shape
    A = action_features.shape[1]
    D = params["ra_b1"].shape[-1]

    # ---- wrapper-side prep (layout plumbing + tiny weight folds) ----
    # Reducer row: the route mask, or 1/N everywhere when the route is empty,
    # so the empty-route mean fallback needs no in-kernel branch.
    mask = route_mask.astype(jnp.float32)
    route_len = jnp.sum(mask, axis=1, keepdims=True)
    reducer = jnp.where(route_len == 0.0, jnp.float32(1.0 / N), mask)[:, None, :]

    # Lane-dense, bf16 stream of the dominant tensor: (B, H, N).
    x_t = jnp.transpose(node_embeddings, (0, 2, 1)).astype(stream_dtype)

    inv_t = 1.0 / params["temperature"].astype(jnp.float32)
    # Fold route_aggregator L2 into the scorer's route half (f32 folds):
    #   route_state @ as_w1r == relu(.) @ (ra_w2 @ as_w1r) + ra_b2 @ as_w1r
    w_rc = params["ra_w2"].astype(jnp.float32) @ params["as_w1r"].astype(jnp.float32)
    b_rc = (params["ra_b2"].astype(jnp.float32) @ params["as_w1r"].astype(jnp.float32)
            + params["as_b1"].astype(jnp.float32))
    wstack = jnp.concatenate(
        [params["ra_w1"], w_rc, params["as_w1a"], params["as_w2"]],
        axis=0).astype(jnp.float32)                                   # [2H+2D, D]
    bias_pack = jnp.zeros((8, D), jnp.float32)
    bias_pack = bias_pack.at[0:1, :].set(params["ra_b1"])
    bias_pack = bias_pack.at[1:2, :].set(b_rc)
    bias_pack = bias_pack.at[2:3, :].set(params["as_b2"])
    bias_pack = bias_pack.at[3:4, :].set(params["as_w3"].T * inv_t)
    bias_pack = bias_pack.at[4, 0].set(params["as_b3"][0, 0] * inv_t)

    # ---- tiling: never collapse to a single full-N block ----
    tile_b = _pick_tile_b(B, tile_b)
    tile_n = _pad_up(min(max(tile_n, 128), _pad_up(N, 128)), 128)
    n_pad = _pad_up(N, tile_n)
    if n_pad != N:   # zero-padded nodes: reducer column is 0 => no contribution
        x_t = jnp.pad(x_t, ((0, 0), (0, 0), (0, n_pad - N)))
        reducer = jnp.pad(reducer, ((0, 0), (0, 0), (0, n_pad - N)))
    grid = (B // tile_b, n_pad // tile_n)
    # TODO(synk): a B with no multiple-of-8 divisor <= tile_b falls back to a
    # single batch tile (correct; only loses megacore sharding of that axis).

    x_item = jnp.dtype(stream_dtype).itemsize
    a_item = action_features.dtype.itemsize
    vmem_est = (
        2 * (_vmem_tile_bytes((tile_b, H, tile_n), x_item)
             + _vmem_tile_bytes((tile_b, 1, tile_n), 4)
             + _vmem_tile_bytes((tile_b, A, H), a_item)
             + _vmem_tile_bytes(wstack.shape, 4)
             + _vmem_tile_bytes(bias_pack.shape, 4)
             + _vmem_tile_bytes((tile_b, A), 4))
        + _vmem_tile_bytes((tile_b, H), 4))
    vmem_cap = _physical_vmem_bytes()
    vmem_limit = int(min(max(2 * vmem_est, 32 * 1024 * 1024), (3 * vmem_cap) // 4))

    kernel = functools.partial(extend_head_kernel, hidden_dim=H, head_dim=D)
    return pl.pallas_call(
        kernel,
        out_shape=jax.ShapeDtypeStruct((B, A), jnp.float32),
        grid_spec=pltpu.PrefetchScalarGridSpec(
            num_scalar_prefetch=0,
            grid=grid,
            in_specs=[
                pl.BlockSpec((tile_b, 1, tile_n), lambda b, n: (b, 0, n)),
                pl.BlockSpec((tile_b, H, tile_n), lambda b, n: (b, 0, n)),
                pl.BlockSpec((tile_b, A, H), lambda b, n: (b, 0, 0)),
                pl.BlockSpec(wstack.shape, lambda b, n: (0, 0)),
                pl.BlockSpec(bias_pack.shape, lambda b, n: (0, 0)),
            ],
            out_specs=pl.BlockSpec((tile_b, A), lambda b, n: (b, 0)),
            scratch_shapes=[pltpu.VMEM((tile_b, H), jnp.float32)],
        ),
        compiler_params=pltpu.CompilerParams(
            dimension_semantics=("parallel", "arbitrary"),
            vmem_limit_bytes=vmem_limit,
        ),
    )(reducer, x_t, action_features, wstack, bias_pack)


def init_params(key, hidden_dim, head_dim):
    ks = jax.random.split(key, 5)

    def linear(k, fan_in, fan_out):
        bound = float(fan_in) ** -0.5
        kw, kb = jax.random.split(k)
        w = jax.random.uniform(kw, (fan_in, fan_out), jnp.float32, -bound, bound)
        b = jax.random.uniform(kb, (1, fan_out), jnp.float32, -bound, bound)
        return w, b

    p = {}
    # route_aggregator: Linear(H, D) -> ReLU -> Linear(D, H)
    p["ra_w1"], p["ra_b1"] = linear(ks[0], hidden_dim, head_dim)
    p["ra_w2"], p["ra_b2"] = linear(ks[1], head_dim, hidden_dim)
    # action_scorer: Linear(2H, D) -> ReLU -> Drop -> Linear(D, D) -> ReLU -> Drop -> Linear(D, 1)
    w1, p["as_b1"] = linear(ks[2], 2 * hidden_dim, head_dim)
    p["as_w1r"], p["as_w1a"] = w1[:hidden_dim], w1[hidden_dim:]
    p["as_w2"], p["as_b2"] = linear(ks[3], head_dim, head_dim)
    p["as_w3"], p["as_b3"] = linear(ks[4], head_dim, 1)
    p["temperature"] = jnp.float32(1.2)   # exploration_temperature (not trained)
    return p


def reference_forward(node_embeddings, route_mask, action_features, params):
    # Pure-JAX mirror of the PyTorch forward (eval mode), unfused, f32.
    x = node_embeddings.astype(jnp.float32)
    m = route_mask.astype(jnp.float32)
    route_summary = jnp.sum(x * m[:, :, None], axis=1)
    empty = jnp.sum(m, axis=1, keepdims=True) == 0.0
    route_summary = jnp.where(empty, jnp.mean(x, axis=1), route_summary)

    route_state = (jnp.maximum(route_summary @ params["ra_w1"] + params["ra_b1"], 0.0)
                   @ params["ra_w2"] + params["ra_b2"])
    A = action_features.shape[1]
    rs = jnp.broadcast_to(route_state[:, None, :],
                          (route_state.shape[0], A, route_state.shape[1]))
    combined = jnp.concatenate([rs, action_features.astype(jnp.float32)], axis=-1)
    w1 = jnp.concatenate([params["as_w1r"], params["as_w1a"]], axis=0)
    h1 = jnp.maximum(combined @ w1 + params["as_b1"], 0.0)
    h2 = jnp.maximum(h1 @ params["as_w2"] + params["as_b2"], 0.0)
    scores = (h2 @ params["as_w3"])[..., 0] + params["as_b3"][0, 0]
    return scores / params["temperature"]


if __name__ == "__main__":
    # B=16 / tile_b=8 -> 2 batch tiles; N=300 / tile_n=128 -> 3 node tiles with
    # zero padding, exercising accumulation, padding, and the empty-route path.
    B, N, A, H, HEAD = 16, 300, 8, 32, 64
    key = jax.random.PRNGKey(0)
    kx, km, ka, kp = jax.random.split(key, 4)

    node_embeddings = jax.random.normal(kx, (B, N, H), jnp.float32)
    route_mask = (jax.random.uniform(km, (B, N)) > 0.5).astype(jnp.float32)
    route_mask = route_mask.at[1].set(0.0)   # exercise the empty-route fallback
    action_features = jax.random.normal(ka, (B, A, H), jnp.float32)
    params = init_params(kp, H, HEAD)

    scores = extend_head_forward(node_embeddings, route_mask, action_features,
                                 params, tile_b=8, tile_n=128)
    scores = jax.block_until_ready(scores)

    ref = reference_forward(node_embeddings, route_mask, action_features, params)
    assert scores.shape == (B, A)
    err = float(jnp.max(jnp.abs(scores - ref)))
    # bf16 streaming of node_embeddings (f32 accumulate) -> loosened tolerance.
    assert jnp.allclose(scores, ref, atol=2e-2, rtol=2e-2), err
    print("KERNEL_OK")
</pallas_src>

<mosaic_0001>
module attributes {stable_mosaic.version = 11 : i64} {
  func.func @extend_head_kernel(%arg0: i32, %arg1: i32, %arg2: memref<8x1x128xf32, #tpu.memory_space<vmem>>, %arg3: memref<8x32x128xbf16, #tpu.memory_space<vmem>>, %arg4: memref<8x8x32xf32, #tpu.memory_space<vmem>>, %arg5: memref<192x64xf32, #tpu.memory_space<vmem>>, %arg6: memref<8x64xf32, #tpu.memory_space<vmem>>, %arg7: memref<8x8xf32, #tpu.memory_space<vmem>>, %arg8: memref<8x32xf32, #tpu.memory_space<vmem>>) attributes {dimension_semantics = [#tpu.dimension_semantics<parallel>, #tpu.dimension_semantics<arbitrary>], iteration_bounds = array<i64: 2, 3>, scalar_prefetch = 0 : i64, scratch_operands = 1 : i64, tpu.core_type = #tpu.core_type<tc>, window_params = [{transform_indices = @transform_0, window_bounds = array<i64: 8, 1, 128>}, {transform_indices = @transform_1, window_bounds = array<i64: 8, 32, 128>}, {transform_indices = @transform_2, window_bounds = array<i64: 8, 8, 32>}, {pipeline_mode = #tpu.pipeline_mode<synchronous>, transform_indices = @transform_3, window_bounds = array<i64: 192, 64>}, {pipeline_mode = #tpu.pipeline_mode<synchronous>, transform_indices = @transform_4, window_bounds = array<i64: 8, 64>}, {transform_indices = @transform_5, window_bounds = array<i64: 8, 8>}]} {
    %c0_i32 = arith.constant 0 : i32
    %0 = arith.cmpi eq, %arg1, %c0_i32 : i32
    %1 = arith.extui %0 : i1 to i32
    %c0_i32_0 = arith.constant 0 : i32
    %2 = arith.cmpi ne, %1, %c0_i32_0 : i32
    scf.if %2 {
      %cst_11 = arith.constant 0.000000e+00 : f32
      %15 = vector.broadcast %cst_11 : f32 to vector<8x32xf32>
      %c0_12 = arith.constant 0 : index
      %c0_13 = arith.constant 0 : index
      %16 = vector.load %arg8[%c0_12, %c0_13] : memref<8x32xf32, #tpu.memory_space<vmem>>, vector<8x32xf32>
      tpu.vector_store %arg8[%c0_12, %c0_13], %15 {strides = array<i32>} : memref<8x32xf32, #tpu.memory_space<vmem>>, vector<8x32xf32>,
    } else {
    }
    %c0 = arith.constant 0 : index
    %c0_1 = arith.constant 0 : index
    %3 = vector.load %arg8[%c0, %c0_1] : memref<8x32xf32, #tpu.memory_space<vmem>>, vector<8x32xf32>
    %c0_2 = arith.constant 0 : index
    %c0_3 = arith.constant 0 : index
    %c0_4 = arith.constant 0 : index
    %4 = vector.load %arg3[%c0_2, %c0_3, %c0_4] : memref<8x32x128xbf16, #tpu.memory_space<vmem>>, vector<8x32x128xbf16>
    %c0_5 = arith.constant 0 : index
    %c0_6 = arith.constant 0 : index
    %c0_7 = arith.constant 0 : index
    %5 = vector.load %arg2[%c0_5, %c0_6, %c0_7] : memref<8x1x128xf32, #tpu.memory_space<vmem>>, vector<8x1x128xf32>
    %6 = arith.extf %4 : vector<8x32x128xbf16> to vector<8x32x128xf32>
    %7 = vector.broadcast %5 : vector<8x1x128xf32> to vector<8x32x128xf32>
    %8 = arith.mulf %6, %7 : vector<8x32x128xf32>
    %cst = arith.constant dense<0.000000e+00> : vector<8x32xf32>
    %9 = vector.multi_reduction <add>, %8, %cst [2] : vector<8x32x128xf32> to vector<8x32xf32>
    %10 = arith.addf %3, %9 : vector<8x32xf32>
    %c0_8 = arith.constant 0 : index
    %c0_9 = arith.constant 0 : index
    %11 = vector.load %arg8[%c0_8, %c0_9] : memref<8x32xf32, #tpu.memory_space<vmem>>, vector<8x32xf32>
    tpu.vector_store %arg8[%c0_8, %c0_9], %10 {strides = array<i32>} : memref<8x32xf32, #tpu.memory_space<vmem>>, vector<8x32xf32>,
    %c2_i32 = arith.constant 2 : i32
    %12 = arith.cmpi eq, %arg1, %c2_i32 : i32
    %13 = arith.extui %12 : i1 to i32
    %c0_i32_10 = arith.constant 0 : i32
    %14 = arith.cmpi ne, %13, %c0_i32_10 : i32
    scf.if %14 {
      %c0_11 = arith.constant 0 : index
      %c0_12 = arith.constant 0 : index
      %15 = vector.load %arg5[%c0_11, %c0_12] : memref<192x64xf32, #tpu.memory_space<vmem>>, vector<32x64xf32>
      %c32 = arith.constant 32 : index
      %c0_13 = arith.constant 0 : index
      %16 = vector.load %arg5[%c32, %c0_13] : memref<192x64xf32, #tpu.memory_space<vmem>>, vector<64x64xf32>
      %c96 = arith.constant 96 : index
      %c0_14 = arith.constant 0 : index
      %17 = vector.load %arg5[%c96, %c0_14] : memref<192x64xf32, #tpu.memory_space<vmem>>, vector<32x64xf32>
      %c128 = arith.constant 128 : index
      %c0_15 = arith.constant 0 : index
      %18 = vector.load %arg5[%c128, %c0_15] : memref<192x64xf32, #tpu.memory_space<vmem>>, vector<64x64xf32>
      %c0_16 = arith.constant 0 : index
      %c0_17 = arith.constant 0 : index
      %19 = vector.load %arg6[%c0_16, %c0_17] : memref<8x64xf32, #tpu.memory_space<vmem>>, vector<1x64xf32>
      %c1 = arith.constant 1 : index
      %c0_18 = arith.constant 0 : index
      %20 = vector.load %arg6[%c1, %c0_18] : memref<8x64xf32, #tpu.memory_space<vmem>>, vector<1x64xf32>
      %c2 = arith.constant 2 : index
      %c0_19 = arith.constant 0 : index
      %21 = vector.load %arg6[%c2, %c0_19] : memref<8x64xf32, #tpu.memory_space<vmem>>, vector<1x64xf32>
      %c3 = arith.constant 3 : index
      %c0_20 = arith.constant 0 : index
      %22 = vector.load %arg6[%c3, %c0_20] : memref<8x64xf32, #tpu.memory_space<vmem>>, vector<1x64xf32>
      %c4 = arith.constant 4 : index
      %c0_21 = arith.constant 0 : index
      %23 = vector.load %arg6[%c4, %c0_21] : memref<8x64xf32, #tpu.memory_space<vmem>>, vector<1x1xf32>
      %c0_22 = arith.constant 0 : index
      %c0_23 = arith.constant 0 : index
      %24 = vector.load %arg8[%c0_22, %c0_23] : memref<8x32xf32, #tpu.memory_space<vmem>>, vector<8x32xf32>
      %cst_24 = arith.constant dense<0.000000e+00> : vector<8x64xf32>
      %25 = tpu.matmul %24, %15, %cst_24 {dimension_numbers = #tpu.dot_dimension_numbers<[1], [0], [0], [1], [0, 0, 1, 1], [], []>} : vector<8x32xf32>, vector<32x64xf32>, vector<8x64xf32> -> vector<8x64xf32>
      %26 = vector.broadcast %19 : vector<1x64xf32> to vector<8x64xf32>
      %27 = arith.addf %25, %26 : vector<8x64xf32>
      %cst_25 = arith.constant 0.000000e+00 : f32
      %28 = vector.broadcast %cst_25 : f32 to vector<8x64xf32>
      %29 = arith.maximumf %27, %28 : vector<8x64xf32>
      %cst_26 = arith.constant dense<0.000000e+00> : vector<8x64xf32>
      %30 = tpu.matmul %29, %16, %cst_26 {dimension_numbers = #tpu.dot_dimension_numbers<[1], [0], [0], [1], [0, 0, 1, 1], [], []>} : vector<8x64xf32>, vector<64x64xf32>, vector<8x64xf32> -> vector<8x64xf32>
      %31 = vector.broadcast %20 : vector<1x64xf32> to vector<8x64xf32>
      %32 = arith.addf %30, %31 : vector<8x64xf32>
      %c0_27 = arith.constant 0 : index
      %c0_28 = arith.constant 0 : index
      %c0_29 = arith.constant 0 : index
      %33 = vector.load %arg4[%c0_27, %c0_28, %c0_29] : memref<8x8x32xf32, #tpu.memory_space<vmem>>, vector<8x8x32xf32>
      %34 = vector.shape_cast %33 : vector<8x8x32xf32> to vector<64x32xf32>
      %cst_30 = arith.constant dense<0.000000e+00> : vector<64x64xf32>
      %35 = tpu.matmul %34, %17, %cst_30 {dimension_numbers = #tpu.dot_dimension_numbers<[1], [0], [0], [1], [0, 0, 1, 1], [], []>} : vector<64x32xf32>, vector<32x64xf32>, vector<64x64xf32> -> vector<64x64xf32>
      %36 = vector.shape_cast %35 : vector<64x64xf32> to vector<8x8x64xf32>
      %37 = vector.shape_cast %32 : vector<8x64xf32> to vector<8x1x64xf32>
      %38 = vector.broadcast %37 : vector<8x1x64xf32> to vector<8x8x64xf32>
      %39 = arith.addf %36, %38 : vector<8x8x64xf32>
      %cst_31 = arith.constant 0.000000e+00 : f32
      %40 = vector.broadcast %cst_31 : f32 to vector<8x8x64xf32>
      %41 = arith.maximumf %39, %40 : vector<8x8x64xf32>
      %42 = vector.shape_cast %41 : vector<8x8x64xf32> to vector<64x64xf32>
      %cst_32 = arith.constant dense<0.000000e+00> : vector<64x64xf32>
      %43 = tpu.matmul %42, %18, %cst_32 {dimension_numbers = #tpu.dot_dimension_numbers<[1], [0], [0], [1], [0, 0, 1, 1], [], []>} : vector<64x64xf32>, vector<64x64xf32>, vector<64x64xf32> -> vector<64x64xf32>
      %44 = vector.shape_cast %43 : vector<64x64xf32> to vector<8x8x64xf32>
      %45 = vector.shape_cast %21 : vector<1x64xf32> to vector<1x1x64xf32>
      %46 = vector.broadcast %45 : vector<1x1x64xf32> to vector<8x8x64xf32>
      %47 = arith.addf %44, %46 : vector<8x8x64xf32>
      %cst_33 = arith.constant 0.000000e+00 : f32
      %48 = vector.broadcast %cst_33 : f32 to vector<8x8x64xf32>
      %49 = arith.maximumf %47, %48 : vector<8x8x64xf32>
      %50 = vector.shape_cast %22 : vector<1x64xf32> to vector<1x1x64xf32>
      %51 = vector.broadcast %50 : vector<1x1x64xf32> to vector<8x8x64xf32>
      %52 = arith.mulf %49, %51 : vector<8x8x64xf32>
      %cst_34 = arith.constant dense<0.000000e+00> : vector<8x8xf32>
      %53 = vector.multi_reduction <add>, %52, %cst_34 [2] : vector<8x8x64xf32> to vector<8x8xf32>
      %54 = vector.broadcast %23 : vector<1x1xf32> to vector<8x8xf32>
      %55 = arith.addf %53, %54 : vector<8x8xf32>
      %c0_35 = arith.constant 0 : index
      %c0_36 = arith.constant 0 : index
      %56 = vector.load %arg7[%c0_35, %c0_36] : memref<8x8xf32, #tpu.memory_space<vmem>>, vector<8x8xf32>
      tpu.vector_store %arg7[%c0_35, %c0_36], %55 {strides = array<i32>} : memref<8x8xf32, #tpu.memory_space<vmem>>, vector<8x8xf32>,
    } else {
    }
    return
  }
  func.func @transform_0(%arg0: i32, %arg1: i32) -> (i32, i32, i32) {
    %c0_i32 = arith.constant 0 : i32
    %c0_i32_0 = arith.constant 0 : i32
    return %arg0, %c0_i32, %arg1 : i32, i32, i32
  }
  func.func @transform_1(%arg0: i32, %arg1: i32) -> (i32, i32, i32) {
    %c0_i32 = arith.constant 0 : i32
    %c0_i32_0 = arith.constant 0 : i32
    return %arg0, %c0_i32, %arg1 : i32, i32, i32
  }
  func.func @transform_2(%arg0: i32, %arg1: i32) -> (i32, i32, i32) {
    %c0_i32 = arith.constant 0 : i32
    %c0_i32_0 = arith.constant 0 : i32
    %c0_i32_1 = arith.constant 0 : i32
    return %arg0, %c0_i32, %c0_i32_0 : i32, i32, i32
  }
  func.func @transform_3(%arg0: i32, %arg1: i32) -> (i32, i32) {
    %c0_i32 = arith.constant 0 : i32
    %c0_i32_0 = arith.constant 0 : i32
    %c0_i32_1 = arith.constant 0 : i32
    return %c0_i32, %c0_i32_0 : i32, i32
  }
  func.func @transform_4(%arg0: i32, %arg1: i32) -> (i32, i32) {
    %c0_i32 = arith.constant 0 : i32
    %c0_i32_0 = arith.constant 0 : i32
    %c0_i32_1 = arith.constant 0 : i32
    return %c0_i32, %c0_i32_0 : i32, i32
  }
  func.func @transform_5(%arg0: i32, %arg1: i32) -> (i32, i32) {
    %c0_i32 = arith.constant 0 : i32
    %c0_i32_0 = arith.constant 0 : i32
    return %arg0, %c0_i32 : i32, i32
  }
}

</mosaic_0001>

<llo_original>
// kernel: extend_head_forward.1
$region0: #{extend_head_forward.1}
  #allocation0 [shape = 'u32[]', space=smem, size = 0x4, offset = 0x4, fixed_abs, tag = 'smem constant byte address 0x4 - core index']
  #allocation1 [shape = 'u32[72,128]{1,0:T(1,128)}', space=vmem, size = 0x9000, scoped, tag = 'internal scratch']
  #allocation2 [shape = 'f32[8,32]{1,0:T(8,128)}', space=vmem, size = 0x1000, scoped, tag = 'scratch operand']
  %s0 = inlined_call_operand.vmem [shape: f32[16,1,384], index: 0, kind: input, shape index: {}]
  %s1 = inlined_call_operand.vmem [shape: bf16[16,32,384], index: 1, kind: input, shape index: {}]
  %s2 = inlined_call_operand.vmem [shape: f32[16,8,32], index: 2, kind: input, shape index: {}]
  %s3 = inlined_call_operand.vmem [shape: f32[192,64], index: 3, kind: input, shape index: {}]
  %s4 = inlined_call_operand.vmem [shape: f32[8,64], index: 4, kind: input, shape index: {}]
  %s5 = inlined_call_operand.vmem [shape: f32[16,8], index: 5, kind: output, shape index: {}]
  %s6 = sld [smem:[#allocation0]]
  $region143: #{extend_head_forward.1} parent=0
    _
  %s8 = ssub.s32 1, %s6
  %s9 = scalar_select 0, %s8, %s6
  $region1: #{extend_head_forward.1} parent=0
    #allocation3 [shape = 'u8[8192]{0}', space=vmem, size = 0x2000, scoped, tag = 'input window, operand 0']
    #allocation4 [shape = 'u8[131072]{0}', space=vmem, size = 0x20000, scoped, tag = 'input window, operand 1']
    loop: start=0, step=1, limit=8
    $region2: #{extend_head_forward.1} parent=1 // loop_pre_header
      _
    $region3: #{extend_head_forward.1} parent=1 // loop_header
      %s11 = sphi 0, %s15
      %p12 = scmp.ge.s32.totalorder %s11, 8
      %s18 = sphi 0, %s30
      %s19 = sphi 0, %s26
      %s20 = sphi 0, %s18
      %s21 = sphi 0, %s19
      %s22 = sphi 0, %s20
      %s23 = sphi 0, %s21
      %s35 = sphi 0, %s37
      %s38 = sphi 0, %s35
      %s39 = sphi 0, %s38
      %s55 = sphi 0, %s39
      %s63 = sphi 0, %s65
      %s66 = sphi 0, %s63
      %s67 = sphi 0, %s66
      %s83 = sphi 0, %s67
      %s89 = sphi 0, %s91
      %s92 = sphi 0, %s89
      %s93 = sphi 0, %s92
      %s109 = sphi 0, %s93
      %s113 = sphi 0, %s113
      %s115 = sphi 0, %s113
      %s116 = sphi 0, %s115
      %s130 = sphi 0, %s116
      %s134 = sphi 0, %s134
      %s136 = sphi 0, %s134
      %s137 = sphi 0, %s136
      %s151 = sphi 0, %s137
      %s157 = sphi 0, %s159
      %s160 = sphi 0, %s157
      %s161 = sphi 0, %s160
      %s177 = sphi 0, %s161
    $region4: #{extend_head_forward.1} parent=1 // loop_header_branch
      %14 = sbr.rel (%p12) target = $region8
    $region5: #{extend_head_forward.1} parent=1 // loop_body
      %s16 = ssub.s32 %s11, 1
      %s17 = ssub.s32 %s11, 2
      %s24 = sadd.s32 1, %s19
      %p25 = scmp.ge.s32.totalorder %s24, 3
      %s26 = scalar_select %p25, 0, %s24
      %s27 = sadd.s32 1, %s18
      %s28 = scalar_select %p25, %s27, %s18
      %p29 = scmp.ge.s32.totalorder %s28, 2
      %s30 = scalar_select %p29, 0, %s28
      %s31 = ssub.s32 %s18, %s30
      %s32 = ssub.s32 %s19, %s26
      %s33 = sor.u32 %s31, %s32
      %p34 = scmp.eq.s32.totalorder %s33, 0
      %s36 = sadd.s32 %s35, 1
      %s37 = scalar_select %p34, %s35, %s36
      %p40 = pneg %p34
      %p41 = scmp.eq.s32.totalorder %s11, 5
      %p42 = por %p40, %p41
      %p43 = scmp.ne.s32.totalorder %s35, %s38
      %p44 = scmp.eq.s32.totalorder %s11, 0
      %p45 = por %p43, %p44
      %p46 = scmp.ne.s32.totalorder %s35, %s38
      %p47 = scmp.eq.s32.totalorder %s16, 5
      %p48 = por %p46, %p47
      %p49 = scmp.ne.s32.totalorder %s38, %s39
      %p50 = scmp.eq.s32.totalorder %s16, 0
      %p51 = por %p49, %p50
      %p52 = scmp.ne.s32.totalorder %s38, %s39
      %p53 = scmp.eq.s32.totalorder %s17, 5
      %p54 = por %p52, %p53
      %p56 = scmp.ne.s32.totalorder %s39, %s55
      %p57 = scmp.eq.s32.totalorder %s17, 0
      %p58 = por %p56, %p57
      %s59 = ssub.s32 %s18, %s30
      %s60 = ssub.s32 %s19, %s26
      %s61 = sor.u32 %s59, %s60
      %p62 = scmp.eq.s32.totalorder %s61, 0
      %s64 = sadd.s32 %s63, 1
      %s65 = scalar_select %p62, %s63, %s64
      %p68 = pneg %p62
      %p69 = scmp.eq.s32.totalorder %s11, 5
      %p70 = por %p68, %p69
      %p71 = scmp.ne.s32.totalorder %s63, %s66
      %p72 = scmp.eq.s32.totalorder %s11, 0
      %p73 = por %p71, %p72
      %p74 = scmp.ne.s32.totalorder %s63, %s66
      %p75 = scmp.eq.s32.totalorder %s16, 5
      %p76 = por %p74, %p75
      %p77 = scmp.ne.s32.totalorder %s66, %s67
      %p78 = scmp.eq.s32.totalorder %s16, 0
      %p79 = por %p77, %p78
      %p80 = scmp.ne.s32.totalorder %s66, %s67
      %p81 = scmp.eq.s32.totalorder %s17, 5
      %p82 = por %p80, %p81
      %p84 = scmp.ne.s32.totalorder %s67, %s83
      %p85 = scmp.eq.s32.totalorder %s17, 0
      %p86 = por %p84, %p85
      %s87 = ssub.s32 %s18, %s30
      %p88 = scmp.eq.s32.totalorder %s87, 0
      %s90 = sadd.s32 %s89, 1
      %s91 = scalar_select %p88, %s89, %s90
      %p94 = pneg %p88
      %p95 = scmp.eq.s32.totalorder %s11, 5
      %p96 = por %p94, %p95
      %p97 = scmp.ne.s32.totalorder %s89, %s92
      %p98 = scmp.eq.s32.totalorder %s11, 0
      %p99 = por %p97, %p98
      %p100 = scmp.ne.s32.totalorder %s89, %s92
      %p101 = scmp.eq.s32.totalorder %s16, 5
      %p102 = por %p100, %p101
      %p103 = scmp.ne.s32.totalorder %s92, %s93
      %p104 = scmp.eq.s32.totalorder %s16, 0
      %p105 = por %p103, %p104
      %p106 = scmp.ne.s32.totalorder %s92, %s93
      %p107 = scmp.eq.s32.totalorder %s17, 5
      %p108 = por %p106, %p107
      %p110 = scmp.ne.s32.totalorder %s93, %s109
      %p111 = scmp.eq.s32.totalorder %s17, 0
      %p112 = por %p110, %p111
      %s114 = sadd.s32 %s113, 1
      %p117 = scmp.eq.s32.totalorder %s11, 5
      %p118 = scmp.ne.s32.totalorder %s113, %s115
      %p119 = scmp.eq.s32.totalorder %s11, 0
      %p120 = por %p118, %p119
      %p121 = scmp.ne.s32.totalorder %s113, %s115
      %p122 = scmp.eq.s32.totalorder %s16, 5
      %p123 = por %p121, %p122
      %p124 = scmp.ne.s32.totalorder %s115, %s116
      %p125 = scmp.eq.s32.totalorder %s16, 0
      %p126 = por %p124, %p125
      %p127 = scmp.ne.s32.totalorder %s115, %s116
      %p128 = scmp.eq.s32.totalorder %s17, 5
      %p129 = por %p127, %p128
      %p131 = scmp.ne.s32.totalorder %s116, %s130
      %p132 = scmp.eq.s32.totalorder %s17, 0
      %p133 = por %p131, %p132
      %s135 = sadd.s32 %s134, 1
      %p138 = scmp.eq.s32.totalorder %s11, 5
      %p139 = scmp.ne.s32.totalorder %s134, %s136
      %p140 = scmp.eq.s32.totalorder %s11, 0
      %p141 = por %p139, %p140
      %p142 = scmp.ne.s32.totalorder %s134, %s136
      %p143 = scmp.eq.s32.totalorder %s16, 5
      %p144 = por %p142, %p143
      %p145 = scmp.ne.s32.totalorder %s136, %s137
      %p146 = scmp.eq.s32.totalorder %s16, 0
      %p147 = por %p145, %p146
      %p148 = scmp.ne.s32.totalorder %s136, %s137
      %p149 = scmp.eq.s32.totalorder %s17, 5
      %p150 = por %p148, %p149
      %p152 = scmp.ne.s32.totalorder %s137, %s151
      %p153 = scmp.eq.s32.totalorder %s17, 0
      %p154 = por %p152, %p153
      %s155 = ssub.s32 %s18, %s30
      %p156 = scmp.eq.s32.totalorder %s155, 0
      %s158 = sadd.s32 %s157, 1
      %s159 = scalar_select %p156, %s157, %s158
      %p162 = pneg %p156
      %p163 = scmp.eq.s32.totalorder %s11, 5
      %p164 = por %p162, %p163
      %p165 = scmp.ne.s32.totalorder %s157, %s160
      %p166 = scmp.eq.s32.totalorder %s11, 0
      %p167 = por %p165, %p166
      %p168 = scmp.ne.s32.totalorder %s157, %s160
      %p169 = scmp.eq.s32.totalorder %s16, 5
      %p170 = por %p168, %p169
      %p171 = scmp.ne.s32.totalorder %s160, %s161
      %p172 = scmp.eq.s32.totalorder %s16, 0
      %p173 = por %p171, %p172
      %p174 = scmp.ne.s32.totalorder %s160, %s161
      %p175 = scmp.eq.s32.totalorder %s17, 5
      %p176 = por %p174, %p175
      %p178 = scmp.ne.s32.totalorder %s161, %s177
      %p179 = scmp.eq.s32.totalorder %s17, 0
      %p180 = por %p178, %p179
      %p181 = scmp.le.s32.totalorder 1, %s11
      %p182 = scmp.lt.s32.totalorder %s11, 7
      %p183 = pnand %p181, %p182
      %p184 = pneg %p183
      // Predicated region
      $region9: #{extend_head_forward.1} parent=5 // pred_check
        _
      $region10: #{extend_head_forward.1} parent=5 // pred_check_branch
        %186 = sbr.rel (%p183) target = $region12
      $region11: #{extend_head_forward.1} parent=5 // pred_region
        %s187 = ssub.s32 %s11, 1
        // Predicated region
        $region13: #{extend_head_forward.1} parent=11 // pred_check
          %p188 = pneg %p126
        $region14: #{extend_head_forward.1} parent=11 // pred_check_branch
          %190 = sbr.rel (%p188) target = $region16
        $region15: #{extend_head_forward.1} parent=11 // pred_region
          _
        $region16: #{extend_head_forward.1} parent=11 // pred_fallthru
          _
        // Predicated region
        $region17: #{extend_head_forward.1} parent=11 // pred_check
          %p191 = pneg %p147
        $region18: #{extend_head_forward.1} parent=11 // pred_check_branch
          %193 = sbr.rel (%p191) target = $region20
        $region19: #{extend_head_forward.1} parent=11 // pred_region
          _
        $region20: #{extend_head_forward.1} parent=11 // pred_fallthru
          _
      $region12: #{extend_head_forward.1} parent=5 // pred_fallthru
        _
      %p194 = scmp.lt.s32.totalorder %s11, 6
      // Predicated region
      $region21: #{extend_head_forward.1} parent=5 // pred_check
        %p195 = pneg %p194
      $region22: #{extend_head_forward.1} parent=5 // pred_check_branch
        %197 = sbr.rel (%p195) target = $region24
      $region23: #{extend_head_forward.1} parent=5 // pred_region
        // Predicated region
        $region25: #{extend_head_forward.1} parent=23 // pred_check
          %p198 = pneg %p45
        $region26: #{extend_head_forward.1} parent=23 // pred_check_branch
          %200 = sbr.rel (%p198) target = $region28
        $region27: #{extend_head_forward.1} parent=23 // pred_region
          %s201 = sand.u32 %s35, 1
          %s202 = sand.u32 %s35, 1
          %s203 = smul.addr %s202, 8
          %s204 = scalar_lea.vmem [#allocation3], %s203
          %s205 = smul.u32 8, %s18
          %s206 = smul.addr %s205, 3
          %s207 = sadd.s32 %s19, %s206
          %s208 = scalar_lea.vmem %s0, %s207
          // Predicated region
          $region29: #{extend_head_forward.1} parent=27 // pred_check
            _
          $region30: #{extend_head_forward.1} parent=27 // pred_check_branch
            %210 = sbr.rel (0) target = $region32
          $region31: #{extend_head_forward.1} parent=27 // pred_region
            // Predicated region
            $region33: #{extend_head_forward.1} parent=31 // pred_check
              _
            $region34: #{extend_head_forward.1} parent=31 // pred_check_branch
              %212 = sbr.rel target = $region36
            $region35: #{extend_head_forward.1} parent=31 // pred_region
              // Predicated region
              $region48: #{extend_head_forward.1} parent=35 // pred_check
                _
              $region49: #{extend_head_forward.1} parent=35 // pred_check_branch
                %242 = sbr.rel (0) target = $region51
              $region50: #{extend_head_forward.1} parent=35 // pred_region
                loop: start=0, step=1, limit=1
                $region52: #{extend_head_forward.1} parent=50 // loop_pre_header
                  _
                $region53: #{extend_head_forward.1} parent=50 // loop_header
                  %s244 = sphi 0, %s248
                  %p245 = scmp.ge.s32.totalorder %s244, 1
                  %s249 = sphi %s208, %s208
                  %s250 = sphi %s204, %s204
                $region54: #{extend_head_forward.1} parent=50 // loop_header_branch
                  %247 = sbr.rel (%p245) target = $region58
                $region55: #{extend_head_forward.1} parent=50 // loop_body
                  _
                $region56: #{extend_head_forward.1} parent=50 // loop_footer
                  %s248 = sadd.s32 1, %s244
                $region57: #{extend_head_forward.1} parent=50 // loop_footer_branch
                  %243 = sbr.rel target = $region53
                $region58: #{extend_head_forward.1} parent=50 // loop_exit
                  _
                %s252 = ssub.s32 2, 1
                loop: start=0, step=1, limit=1
                $region59: #{extend_head_forward.1} parent=50 // loop_pre_header
                  _
                $region60: #{extend_head_forward.1} parent=50 // loop_header
                  %s254 = sphi 0, %s258
                  %p255 = scmp.ge.s32.totalorder %s254, 1
                  %s259 = sphi %s208, %s208
                  %s260 = sphi %s204, %s204
                $region61: #{extend_head_forward.1} parent=50 // loop_header_branch
                  %257 = sbr.rel (%p255) target = $region65
                $region62: #{extend_head_forward.1} parent=50 // loop_body
                  %v261 = vld [vmem:[%s259] sm:%s252]
                  %262 = vst [vmem:[%s260] sm:%s252] %v261
                  %v263 = vld [vmem:[%s259 + $0x3] sm:%s252]
                  %264 = vst [vmem:[%s260 + $0x1] sm:%s252] %v263
                  %v265 = vld [vmem:[%s259 + $0x6] sm:%s252]
                  %266 = vst [vmem:[%s260 + $0x2] sm:%s252] %v265
                  %v267 = vld [vmem:[%s259 + $0x9] sm:%s252]
                  %268 = vst [vmem:[%s260 + $0x3] sm:%s252] %v267
                  %v269 = vld [vmem:[%s259 + $0xc] sm:%s252]
                  %270 = vst [vmem:[%s260 + $0x4] sm:%s252] %v269
                  %v271 = vld [vmem:[%s259 + $0xf] sm:%s252]
                  %272 = vst [vmem:[%s260 + $0x5] sm:%s252] %v271
                  %v273 = vld [vmem:[%s259 + $0x12] sm:%s252]
                  %274 = vst [vmem:[%s260 + $0x6] sm:%s252] %v273
                  %v275 = vld [vmem:[%s259 + $0x15] sm:%s252]
                  %276 = vst [vmem:[%s260 + $0x7] sm:%s252] %v275
                $region63: #{extend_head_forward.1} parent=50 // loop_footer
                  %s258 = sadd.s32 1, %s254
                $region64: #{extend_head_forward.1} parent=50 // loop_footer_branch
                  %253 = sbr.rel target = $region60
                $region65: #{extend_head_forward.1} parent=50 // loop_exit
                  _
              $region51: #{extend_head_forward.1} parent=35 // pred_fallthru
                _
            $region36: #{extend_head_forward.1} parent=31 // pred_fallthru
              _
            // Predicated region
            $region37: #{extend_head_forward.1} parent=31 // pred_check
              _
            $region38: #{extend_head_forward.1} parent=31 // pred_check_branch
              %214 = sbr.rel (0) target = $region40
            $region39: #{extend_head_forward.1} parent=31 // pred_region
              %s216 = ssub.s32 2, 1
              loop: start=0, step=1, limit=1
              $region41: #{extend_head_forward.1} parent=39 // loop_pre_header
                _
              $region42: #{extend_head_forward.1} parent=39 // loop_header
                %s218 = sphi 0, %s222
                %p219 = scmp.ge.s32.totalorder %s218, 1
                %s223 = sphi %s208, %s208
                %s224 = sphi %s204, %s204
              $region43: #{extend_head_forward.1} parent=39 // loop_header_branch
                %221 = sbr.rel (%p219) target = $region47
              $region44: #{extend_head_forward.1} parent=39 // loop_body
                %v225 = vld [vmem:[%s223] sm:%s216]
                %226 = vst [vmem:[%s224] sm:%s216] %v225
                %v227 = vld [vmem:[%s223 + $0x3] sm:%s216]
                %228 = vst [vmem:[%s224 + $0x1] sm:%s216] %v227
                %v229 = vld [vmem:[%s223 + $0x6] sm:%s216]
                %230 = vst [vmem:[%s224 + $0x2] sm:%s216] %v229
                %v231 = vld [vmem:[%s223 + $0x9] sm:%s216]
                %232 = vst [vmem:[%s224 + $0x3] sm:%s216] %v231
                %v233 = vld [vmem:[%s223 + $0xc] sm:%s216]
                %234 = vst [vmem:[%s224 + $0x4] sm:%s216] %v233
                %v235 = vld [vmem:[%s223 + $0xf] sm:%s216]
                %236 = vst [vmem:[%s224 + $0x5] sm:%s216] %v235
                %v237 = vld [vmem:[%s223 + $0x12] sm:%s216]
                %238 = vst [vmem:[%s224 + $0x6] sm:%s216] %v237
                %v239 = vld [vmem:[%s223 + $0x15] sm:%s216]
                %240 = vst [vmem:[%s224 + $0x7] sm:%s216] %v239
              $region45: #{extend_head_forward.1} parent=39 // loop_footer
                %s222 = sadd.s32 1, %s218
              $region46: #{extend_head_forward.1} parent=39 // loop_footer_branch
                %217 = sbr.rel target = $region42
              $region47: #{extend_head_forward.1} parent=39 // loop_exit
                _
            $region40: #{extend_head_forward.1} parent=31 // pred_fallthru
              _
          $region32: #{extend_head_forward.1} parent=27 // pred_fallthru
            _
          %277 = vnop
        $region28: #{extend_head_forward.1} parent=23 // pred_fallthru
          _
        // Predicated region
        $region66: #{extend_head_forward.1} parent=23 // pred_check
          %p278 = pneg %p73
        $region67: #{extend_head_forward.1} parent=23 // pred_check_branch
          %280 = sbr.rel (%p278) target = $region69
        $region68: #{extend_head_forward.1} parent=23 // pred_region
          %s281 = sand.u32 %s63, 1
          %s282 = sand.u32 %s63, 1
          %s283 = smul.addr %s282, 128
          %s284 = scalar_lea.vmem [#allocation4], %s283
          %s285 = smul.u32 8, %s18
          %s286 = smul.addr %s285, 12
          %s287 = sadd.s32 %s19, %s286
          %s288 = smul.addr %s287, 4
          %s289 = scalar_lea.vmem %s1, %s288
          // Predicated region
          $region70: #{extend_head_forward.1} parent=68 // pred_check
            _
          $region71: #{extend_head_forward.1} parent=68 // pred_check_branch
            %291 = sbr.rel (0) target = $region73
          $region72: #{extend_head_forward.1} parent=68 // pred_region
            // Predicated region
            $region74: #{extend_head_forward.1} parent=72 // pred_check
              _
            $region75: #{extend_head_forward.1} parent=72 // pred_check_branch
              %293 = sbr.rel target = $region77
            $region76: #{extend_head_forward.1} parent=72 // pred_region
              // Predicated region
              $region89: #{extend_head_forward.1} parent=76 // pred_check
                _
              $region90: #{extend_head_forward.1} parent=76 // pred_check_branch
                %371 = sbr.rel (0) target = $region92
              $region91: #{extend_head_forward.1} parent=76 // pred_region
                loop: start=0, step=1, limit=1
                $region93: #{extend_head_forward.1} parent=91 // loop_pre_header
                  _
                $region94: #{extend_head_forward.1} parent=91 // loop_header
                  %s373 = sphi 0, %s377
                  %p374 = scmp.ge.s32.totalorder %s373, 1
                  %s378 = sphi %s289, %s289
                  %s379 = sphi %s284, %s284
                $region95: #{extend_head_forward.1} parent=91 // loop_header_branch
                  %376 = sbr.rel (%p374) target = $region99
                $region96: #{extend_head_forward.1} parent=91 // loop_body
                  _
                $region97: #{extend_head_forward.1} parent=91 // loop_footer
                  %s377 = sadd.s32 1, %s373
                $region98: #{extend_head_forward.1} parent=91 // loop_footer_branch
                  %372 = sbr.rel target = $region94
                $region99: #{extend_head_forward.1} parent=91 // loop_exit
                  _
                %s381 = ssub.s32 16, 1
                loop: start=0, step=1, limit=1
                $region100: #{extend_head_forward.1} parent=91 // loop_pre_header
                  _
                $region101: #{extend_head_forward.1} parent=91 // loop_header
                  %s383 = sphi 0, %s387
                  %p384 = scmp.ge.s32.totalorder %s383, 1
                  %s388 = sphi %s289, %s289
                  %s389 = sphi %s284, %s284
                $region102: #{extend_head_forward.1} parent=91 // loop_header_branch
                  %386 = sbr.rel (%p384) target = $region106
                $region103: #{extend_head_forward.1} parent=91 // loop_body
                  %v390 = vld [vmem:[%s388] sm:%s381]
                  %391 = vst [vmem:[%s389] sm:%s381] %v390
                  %v392 = vld [vmem:[%s388 + $0xc] sm:%s381]
                  %393 = vst [vmem:[%s389 + $0x4] sm:%s381] %v392
                  %v394 = vld [vmem:[%s388 + $0x18] sm:%s381]
                  %395 = vst [vmem:[%s389 + $0x8] sm:%s381] %v394
                  %v396 = vld [vmem:[%s388 + $0x24] sm:%s381]
                  %397 = vst [vmem:[%s389 + $0xc] sm:%s381] %v396
                  %v398 = vld [vmem:[%s388 + $0x30] sm:%s381]
                  %399 = vst [vmem:[%s389 + $0x10] sm:%s381] %v398
                  %v400 = vld [vmem:[%s388 + $0x3c] sm:%s381]
                  %401 = vst [vmem:[%s389 + $0x14] sm:%s381] %v400
                  %v402 = vld [vmem:[%s388 + $0x48] sm:%s381]
                  %403 = vst [vmem:[%s389 + $0x18] sm:%s381] %v402
                  %v404 = vld [vmem:[%s388 + $0x54] sm:%s381]
                  %405 = vst [vmem:[%s389 + $0x1c] sm:%s381] %v404
                  %v406 = vld [vmem:[%s388 + $0x60] sm:%s381]
                  %407 = vst [vmem:[%s389 + $0x20] sm:%s381] %v406
                  %v408 = vld [vmem:[%s388 + $0x6c] sm:%s381]
                  %409 = vst [vmem:[%s389 + $0x24] sm:%s381] %v408
                  %v410 = vld [vmem:[%s388 + $0x78] sm:%s381]
                  %411 = vst [vmem:[%s389 + $0x28] sm:%s381] %v410
                  %v412 = vld [vmem:[%s388 + $0x84] sm:%s381]
                  %413 = vst [vmem:[%s389 + $0x2c] sm:%s381] %v412
                  %v414 = vld [vmem:[%s388 + $0x90] sm:%s381]
                  %415 = vst [vmem:[%s389 + $0x30] sm:%s381] %v414
                  %v416 = vld [vmem:[%s388 + $0x9c] sm:%s381]
                  %417 = vst [vmem:[%s389 + $0x34] sm:%s381] %v416
                  %v418 = vld [vmem:[%s388 + $0xa8] sm:%s381]
                  %419 = vst [vmem:[%s389 + $0x38] sm:%s381] %v418
                  %v420 = vld [vmem:[%s388 + $0xb4] sm:%s381]
                  %421 = vst [vmem:[%s389 + $0x3c] sm:%s381] %v420
                  %v422 = vld [vmem:[%s388 + $0xc0] sm:%s381]
                  %423 = vst [vmem:[%s389 + $0x40] sm:%s381] %v422
                  %v424 = vld [vmem:[%s388 + $0xcc] sm:%s381]
                  %425 = vst [vmem:[%s389 + $0x44] sm:%s381] %v424
                  %v426 = vld [vmem:[%s388 + $0xd8] sm:%s381]
                  %427 = vst [vmem:[%s389 + $0x48] sm:%s381] %v426
                  %v428 = vld [vmem:[%s388 + $0xe4] sm:%s381]
                  %429 = vst [vmem:[%s389 + $0x4c] sm:%s381] %v428
                  %v430 = vld [vmem:[%s388 + $0xf0] sm:%s381]
                  %431 = vst [vmem:[%s389 + $0x50] sm:%s381] %v430
                  %v432 = vld [vmem:[%s388 + $0xfc] sm:%s381]
                  %433 = vst [vmem:[%s389 + $0x54] sm:%s381] %v432
                  %v434 = vld [vmem:[%s388 + $0x108] sm:%s381]
                  %435 = vst [vmem:[%s389 + $0x58] sm:%s381] %v434
                  %v436 = vld [vmem:[%s388 + $0x114] sm:%s381]
                  %437 = vst [vmem:[%s389 + $0x5c] sm:%s381] %v436
                  %v438 = vld [vmem:[%s388 + $0x120] sm:%s381]
                  %439 = vst [vmem:[%s389 + $0x60] sm:%s381] %v438
                  %v440 = vld [vmem:[%s388 + $0x12c] sm:%s381]
                  %441 = vst [vmem:[%s389 + $0x64] sm:%s381] %v440
                  %v442 = vld [vmem:[%s388 + $0x138] sm:%s381]
                  %443 = vst [vmem:[%s389 + $0x68] sm:%s381] %v442
                  %v444 = vld [vmem:[%s388 + $0x144] sm:%s381]
                  %445 = vst [vmem:[%s389 + $0x6c] sm:%s381] %v444
                  %v446 = vld [vmem:[%s388 + $0x150] sm:%s381]
                  %447 = vst [vmem:[%s389 + $0x70] sm:%s381] %v446
                  %v448 = vld [vmem:[%s388 + $0x15c] sm:%s381]
                  %449 = vst [vmem:[%s389 + $0x74] sm:%s381] %v448
                  %v450 = vld [vmem:[%s388 + $0x168] sm:%s381]
                  %451 = vst [vmem:[%s389 + $0x78] sm:%s381] %v450
                  %v452 = vld [vmem:[%s388 + $0x174] sm:%s381]
                  %453 = vst [vmem:[%s389 + $0x7c] sm:%s381] %v452
                $region104: #{extend_head_forward.1} parent=91 // loop_footer
                  %s387 = sadd.s32 1, %s383
                $region105: #{extend_head_forward.1} parent=91 // loop_footer_branch
                  %382 = sbr.rel target = $region101
                $region106: #{extend_head_forward.1} parent=91 // loop_exit
                  _
              $region92: #{extend_head_forward.1} parent=76 // pred_fallthru
                _
            $region77: #{extend_head_forward.1} parent=72 // pred_fallthru
              _
            // Predicated region
            $region78: #{extend_head_forward.1} parent=72 // pred_check
              _
            $region79: #{extend_head_forward.1} parent=72 // pred_check_branch
              %295 = sbr.rel (0) target = $region81
            $region80: #{extend_head_forward.1} parent=72 // pred_region
              %s297 = ssub.s32 16, 1
              loop: start=0, step=1, limit=1
              $region82: #{extend_head_forward.1} parent=80 // loop_pre_header
                _
              $region83: #{extend_head_forward.1} parent=80 // loop_header
                %s299 = sphi 0, %s303
                %p300 = scmp.ge.s32.totalorder %s299, 1
                %s304 = sphi %s289, %s289
                %s305 = sphi %s284, %s284
              $region84: #{extend_head_forward.1} parent=80 // loop_header_branch
                %302 = sbr.rel (%p300) target = $region88
              $region85: #{extend_head_forward.1} parent=80 // loop_body
                %v306 = vld [vmem:[%s304] sm:%s297]
                %307 = vst [vmem:[%s305] sm:%s297] %v306
                %v308 = vld [vmem:[%s304 + $0xc] sm:%s297]
                %309 = vst [vmem:[%s305 + $0x4] sm:%s297] %v308
                %v310 = vld [vmem:[%s304 + $0x18] sm:%s297]
                %311 = vst [vmem:[%s305 + $0x8] sm:%s297] %v310
                %v312 = vld [vmem:[%s304 + $0x24] sm:%s297]
                %313 = vst [vmem:[%s305 + $0xc] sm:%s297] %v312
                %v314 = vld [vmem:[%s304 + $0x30] sm:%s297]
                %315 = vst [vmem:[%s305 + $0x10] sm:%s297] %v314
                %v316 = vld [vmem:[%s304 + $0x3c] sm:%s297]
                %317 = vst [vmem:[%s305 + $0x14] sm:%s297] %v316
                %v318 = vld [vmem:[%s304 + $0x48] sm:%s297]
                %319 = vst [vmem:[%s305 + $0x18] sm:%s297] %v318
                %v320 = vld [vmem:[%s304 + $0x54] sm:%s297]
                %321 = vst [vmem:[%s305 + $0x1c] sm:%s297] %v320
                %v322 = vld [vmem:[%s304 + $0x60] sm:%s297]
                %323 = vst [vmem:[%s305 + $0x20] sm:%s297] %v322
                %v324 = vld [vmem:[%s304 + $0x6c] sm:%s297]
                %325 = vst [vmem:[%s305 + $0x24] sm:%s297] %v324
                %v326 = vld [vmem:[%s304 + $0x78] sm:%s297]
                %327 = vst [vmem:[%s305 + $0x28] sm:%s297] %v326
                %v328 = vld [vmem:[%s304 + $0x84] sm:%s297]
                %329 = vst [vmem:[%s305 + $0x2c] sm:%s297] %v328
                %v330 = vld [vmem:[%s304 + $0x90] sm:%s297]
                %331 = vst [vmem:[%s305 + $0x30] sm:%s297] %v330
                %v332 = vld [vmem:[%s304 + $0x9c] sm:%s297]
                %333 = vst [vmem:[%s305 + $0x34] sm:%s297] %v332
                %v334 = vld [vmem:[%s304 + $0xa8] sm:%s297]
                %335 = vst [vmem:[%s305 + $0x38] sm:%s297] %v334
                %v336 = vld [vmem:[%s304 + $0xb4] sm:%s297]
                %337 = vst [vmem:[%s305 + $0x3c] sm:%s297] %v336
                %v338 = vld [vmem:[%s304 + $0xc0] sm:%s297]
                %339 = vst [vmem:[%s305 + $0x40] sm:%s297] %v338
                %v340 = vld [vmem:[%s304 + $0xcc] sm:%s297]
                %341 = vst [vmem:[%s305 + $0x44] sm:%s297] %v340
                %v342 = vld [vmem:[%s304 + $0xd8] sm:%s297]
                %343 = vst [vmem:[%s305 + $0x48] sm:%s297] %v342
                %v344 = vld [vmem:[%s304 + $0xe4] sm:%s297]
                %345 = vst [vmem:[%s305 + $0x4c] sm:%s297] %v344
                %v346 = vld [vmem:[%s304 + $0xf0] sm:%s297]
                %347 = vst [vmem:[%s305 + $0x50] sm:%s297] %v346
                %v348 = vld [vmem:[%s304 + $0xfc] sm:%s297]
                %349 = vst [vmem:[%s305 + $0x54] sm:%s297] %v348
                %v350 = vld [vmem:[%s304 + $0x108] sm:%s297]
                %351 = vst [vmem:[%s305 + $0x58] sm:%s297] %v350
                %v352 = vld [vmem:[%s304 + $0x114] sm:%s297]
                %353 = vst [vmem:[%s305 + $0x5c] sm:%s297] %v352
                %v354 = vld [vmem:[%s304 + $0x120] sm:%s297]
                %355 = vst [vmem:[%s305 + $0x60] sm:%s297] %v354
                %v356 = vld [vmem:[%s304 + $0x12c] sm:%s297]
                %357 = vst [vmem:[%s305 + $0x64] sm:%s297] %v356
                %v358 = vld [vmem:[%s304 + $0x138] sm:%s297]
                %359 = vst [vmem:[%s305 + $0x68] sm:%s297] %v358
                %v360 = vld [vmem:[%s304 + $0x144] sm:%s297]
                %361 = vst [vmem:[%s305 + $0x6c] sm:%s297] %v360
                %v362 = vld [vmem:[%s304 + $0x150] sm:%s297]
                %363 = vst [vmem:[%s305 + $0x70] sm:%s297] %v362
                %v364 = vld [vmem:[%s304 + $0x15c] sm:%s297]
                %365 = vst [vmem:[%s305 + $0x74] sm:%s297] %v364
                %v366 = vld [vmem:[%s304 + $0x168] sm:%s297]
                %367 = vst [vmem:[%s305 + $0x78] sm:%s297] %v366
                %v368 = vld [vmem:[%s304 + $0x174] sm:%s297]
                %369 = vst [vmem:[%s305 + $0x7c] sm:%s297] %v368
              $region86: #{extend_head_forward.1} parent=80 // loop_footer
                %s303 = sadd.s32 1, %s299
              $region87: #{extend_head_forward.1} parent=80 // loop_footer_branch
                %298 = sbr.rel target = $region83
              $region88: #{extend_head_forward.1} parent=80 // loop_exit
                _
            $region81: #{extend_head_forward.1} parent=72 // pred_fallthru
              _
          $region73: #{extend_head_forward.1} parent=68 // pred_fallthru
            _
          %454 = vnop
        $region69: #{extend_head_forward.1} parent=23 // pred_fallthru
          _
        // Predicated region
        $region107: #{extend_head_forward.1} parent=23 // pred_check
          %p455 = pneg %p99
        $region108: #{extend_head_forward.1} parent=23 // pred_check_branch
          %457 = sbr.rel (%p455) target = $region110
        $region109: #{extend_head_forward.1} parent=23 // pred_region
          %s458 = smul.u32 8, %s18
          %p459 = scmp.lt.s32.totalorder %s458, 15
          %s460 = scalar_select %p459, %s458, 15
          %s461 = smul.addr %s460, 8
          %s462 = scalar_lea.vmem %s2, %s461
          %s463 = smul.u32 8, %s18
        $region110: #{extend_head_forward.1} parent=23 // pred_fallthru
          _
      $region24: #{extend_head_forward.1} parent=5 // pred_fallthru
        _
      %p464 = scmp.le.s32.totalorder 1, %s11
      %p465 = scmp.lt.s32.totalorder %s11, 7
      %p466 = pnand %p464, %p465
      %p467 = pneg %p466
      // Predicated region
      $region111: #{extend_head_forward.1} parent=5 // pred_check
        _
      $region112: #{extend_head_forward.1} parent=5 // pred_check_branch
        %469 = sbr.rel (%p466) target = $region114
      $region113: #{extend_head_forward.1} parent=5 // pred_region
        %s470 = ssub.s32 %s11, 1
        %s471 = sand.u32 %s38, 1
        %s472 = sand.u32 %s38, 1
        %s473 = smul.addr %s472, 8
        %s474 = scalar_lea.vmem [#allocation3], %s473
        // Predicated region
        $region115: #{extend_head_forward.1} parent=113 // pred_check
          %p475 = pneg %p51
        $region116: #{extend_head_forward.1} parent=113 // pred_check_branch
          %477 = sbr.rel (%p475) target = $region118
        $region117: #{extend_head_forward.1} parent=113 // pred_region
          _
        $region118: #{extend_head_forward.1} parent=113 // pred_fallthru
          _
        %s478 = sand.u32 %s66, 1
        %s479 = sand.u32 %s66, 1
        %s480 = smul.addr %s479, 128
        %s481 = scalar_lea.vmem [#allocation4], %s480
        // Predicated region
        $region119: #{extend_head_forward.1} parent=113 // pred_check
          %p482 = pneg %p79
        $region120: #{extend_head_forward.1} parent=113 // pred_check_branch
          %484 = sbr.rel (%p482) target = $region122
        $region121: #{extend_head_forward.1} parent=113 // pred_region
          _
        $region122: #{extend_head_forward.1} parent=113 // pred_fallthru
          _
        %s485 = sand.u32 %s38, 1
        %s486 = sand.u32 %s38, 1
        %s487 = smul.addr %s486, 8
        %s488 = scalar_lea.vmem [#allocation3], %s487
        %p489 = pneg %p51
        %p490 = pneg %p48
        %s491 = sand.u32 %s66, 1
        %s492 = sand.u32 %s66, 1
        %s493 = smul.addr %s492, 128
        %s494 = scalar_lea.vmem [#allocation4], %s493
        %p495 = pneg %p79
        %p496 = pneg %p76
        %s497 = smul.u32 8, %s20
        %p498 = scmp.lt.s32.totalorder %s497, 15
        %s499 = scalar_select %p498, %s497, 15
        %s500 = smul.addr %s499, 8
        %s501 = scalar_lea.vmem %s2, %s500
        %p502 = pneg %p105
        %p503 = pneg %p102
        %p504 = pneg %p126
        %p505 = pneg %p123
        %p506 = pneg %p147
        %p507 = pneg %p144
        %p508 = pneg %p173
        %p509 = pneg %p170
        %p510 = scmp.lt.s32.totalorder %s20, 1
        %s511 = scalar_select %p510, %s20, 1
        %s512 = smul.addr %s511, 8
        %s513 = scalar_lea.vmem %s5, %s512
        %s514 = smul.u32 8, %s20
        %s515 = smul.u32 8, %s20
        %s516 = smul.u32 8, %s20
        %p517 = scmp.lt.s32.totalorder %s516, 15
        %s518 = scalar_select %p517, %s516, 15
        %s519 = smul.addr %s518, 8
        %s520 = scalar_lea.vmem %s2, %s519
        %s521 = smul.u32 8, %s20
        %p522 = scmp.lt.s32.totalorder %s20, 1
        %s523 = scalar_select %p522, %s20, 1
        %s524 = smul.addr %s523, 8
        %s525 = scalar_lea.vmem %s5, %s524
        %p526 = scmp.eq.s32.totalorder %s21, 0
        // Predicated region
        $region123: #{extend_head_forward.1} parent=113 // pred_check
          %p527 = pneg %p526
        $region124: #{extend_head_forward.1} parent=113 // pred_check_branch
          %529 = sbr.rel (%p527) target = $region126
        $region125: #{extend_head_forward.1} parent=113 // pred_region
          %vm530 = vcmask 261120
          %531 = vst.msk [vmem:[#allocation2] sm:$0xff] %vm530, 0.0
        $region126: #{extend_head_forward.1} parent=113 // pred_fallthru
          _
        %v532 = vld [vmem:[#allocation2] sm:$0xff]
        %v533 = vld [vmem:[%s481] sm:$0xf]
        %v534 = vld [vmem:[%s481 + $0x4] sm:$0xf]
        %v535 = vld [vmem:[%s481 + $0x8] sm:$0xf]
        %v536 = vld [vmem:[%s481 + $0xc] sm:$0xf]
        %v537 = vld [vmem:[%s481 + $0x10] sm:$0xf]
        %v538 = vld [vmem:[%s481 + $0x14] sm:$0xf]
        %v539 = vld [vmem:[%s481 + $0x18] sm:$0xf]
        %v540 = vld [vmem:[%s481 + $0x1c] sm:$0xf]
        %v541 = vld [vmem:[%s481 + $0x20] sm:$0xf]
        %v542 = vld [vmem:[%s481 + $0x24] sm:$0xf]
        %v543 = vld [vmem:[%s481 + $0x28] sm:$0xf]
        %v544 = vld [vmem:[%s481 + $0x2c] sm:$0xf]
        %v545 = vld [vmem:[%s481 + $0x30] sm:$0xf]
        %v546 = vld [vmem:[%s481 + $0x34] sm:$0xf]
        %v547 = vld [vmem:[%s481 + $0x38] sm:$0xf]
        %v548 = vld [vmem:[%s481 + $0x3c] sm:$0xf]
        %v549 = vld [vmem:[%s481 + $0x40] sm:$0xf]
        %v550 = vld [vmem:[%s481 + $0x44] sm:$0xf]
        %v551 = vld [vmem:[%s481 + $0x48] sm:$0xf]
        %v552 = vld [vmem:[%s481 + $0x4c] sm:$0xf]
        %v553 = vld [vmem:[%s481 + $0x50] sm:$0xf]
        %v554 = vld [vmem:[%s481 + $0x54] sm:$0xf]
        %v555 = vld [vmem:[%s481 + $0x58] sm:$0xf]
        %v556 = vld [vmem:[%s481 + $0x5c] sm:$0xf]
        %v557 = vld [vmem:[%s481 + $0x60] sm:$0xf]
        %v558 = vld [vmem:[%s481 + $0x64] sm:$0xf]
        %v559 = vld [vmem:[%s481 + $0x68] sm:$0xf]
        %v560 = vld [vmem:[%s481 + $0x6c] sm:$0xf]
        %v561 = vld [vmem:[%s481 + $0x70] sm:$0xf]
        %v562 = vld [vmem:[%s481 + $0x74] sm:$0xf]
        %v563 = vld [vmem:[%s481 + $0x78] sm:$0xf]
        %v564 = vld [vmem:[%s481 + $0x7c] sm:$0xf]
        %v565 = vld [vmem:[%s474] sm:$0x1]
        %v566 = vld [vmem:[%s474 + $0x1] sm:$0x1]
        %v567 = vld [vmem:[%s474 + $0x2] sm:$0x1]
        %v568 = vld [vmem:[%s474 + $0x3] sm:$0x1]
        %v569 = vld [vmem:[%s474 + $0x4] sm:$0x1]
        %v570 = vld [vmem:[%s474 + $0x5] sm:$0x1]
        %v571 = vld [vmem:[%s474 + $0x6] sm:$0x1]
        %v572 = vld [vmem:[%s474 + $0x7] sm:$0x1]
        %v573 = vunpack.c.l.bf16 %v533
        %v574 = vunpack.c.l.bf16 %v534
        %v575 = vunpack.c.l.bf16 %v535
        %v576 = vunpack.c.l.bf16 %v536
        %v577 = vunpack.c.l.bf16 %v537
        %v578 = vunpack.c.l.bf16 %v538
        %v579 = vunpack.c.l.bf16 %v539
        %v580 = vunpack.c.l.bf16 %v540
        %v581 = vunpack.c.l.bf16 %v541
        %v582 = vunpack.c.l.bf16 %v542
        %v583 = vunpack.c.l.bf16 %v543
        %v584 = vunpack.c.l.bf16 %v544
        %v585 = vunpack.c.l.bf16 %v545
        %v586 = vunpack.c.l.bf16 %v546
        %v587 = vunpack.c.l.bf16 %v547
        %v588 = vunpack.c.l.bf16 %v548
        %v589 = vunpack.c.l.bf16 %v549
        %v590 = vunpack.c.l.bf16 %v550
        %v591 = vunpack.c.l.bf16 %v551
        %v592 = vunpack.c.l.bf16 %v552
        %v593 = vunpack.c.l.bf16 %v553
        %v594 = vunpack.c.l.bf16 %v554
        %v595 = vunpack.c.l.bf16 %v555
        %v596 = vunpack.c.l.bf16 %v556
        %v597 = vunpack.c.l.bf16 %v557
        %v598 = vunpack.c.l.bf16 %v558
        %v599 = vunpack.c.l.bf16 %v559
        %v600 = vunpack.c.l.bf16 %v560
        %v601 = vunpack.c.l.bf16 %v561
        %v602 = vunpack.c.l.bf16 %v562
        %v603 = vunpack.c.l.bf16 %v563
        %v604 = vunpack.c.l.bf16 %v564
        %v613 = vperm.slane %v565, 0
        %v614 = vperm.slane %v566, 0
        %v615 = vperm.slane %v567, 0
        %v616 = vperm.slane %v568, 0
        %v617 = vperm.slane %v569, 0
        %v618 = vperm.slane %v570, 0
        %v619 = vperm.slane %v571, 0
        %v620 = vperm.slane %v572, 0
        %v629 = vmul.f32 %v573, %v613
        %v630 = vmul.f32 %v574, %v613
        %v631 = vmul.f32 %v575, %v613
        %v632 = vmul.f32 %v576, %v613
        %v633 = vmul.f32 %v577, %v614
        %v634 = vmul.f32 %v578, %v614
        %v635 = vmul.f32 %v579, %v614
        %v636 = vmul.f32 %v580, %v614
        %v637 = vmul.f32 %v581, %v615
        %v638 = vmul.f32 %v582, %v615
        %v639 = vmul.f32 %v583, %v615
        %v640 = vmul.f32 %v584, %v615
        %v641 = vmul.f32 %v585, %v616
        %v642 = vmul.f32 %v586, %v616
        %v643 = vmul.f32 %v587, %v616
        %v644 = vmul.f32 %v588, %v616
        %v645 = vmul.f32 %v589, %v617
        %v646 = vmul.f32 %v590, %v617
        %v647 = vmul.f32 %v591, %v617
        %v648 = vmul.f32 %v592, %v617
        %v649 = vmul.f32 %v593, %v618
        %v650 = vmul.f32 %v594, %v618
        %v651 = vmul.f32 %v595, %v618
        %v652 = vmul.f32 %v596, %v618
        %v653 = vmul.f32 %v597, %v619
        %v654 = vmul.f32 %v598, %v619
        %v655 = vmul.f32 %v599, %v619
        %v656 = vmul.f32 %v600, %v619
        %v657 = vmul.f32 %v601, %v620
        %v658 = vmul.f32 %v602, %v620
        %v659 = vmul.f32 %v603, %v620
        %v660 = vmul.f32 %v604, %v620
        %661 = vadd.xlane.f32.xlu0 %v629
        %v662 = vpop.xlane.xlu0 %661
        %663 = vadd.xlane.f32.xlu0 %v630
        %v664 = vpop.xlane.xlu0 %663
        %665 = vadd.xlane.f32.xlu0 %v631
        %v666 = vpop.xlane.xlu0 %665
        %667 = vadd.xlane.f32.xlu0 %v632
        %v668 = vpop.xlane.xlu0 %667
        %669 = vadd.xlane.f32.xlu0 %v633
        %v670 = vpop.xlane.xlu0 %669
        %671 = vadd.xlane.f32.xlu0 %v634
        %v672 = vpop.xlane.xlu0 %671
        %673 = vadd.xlane.f32.xlu0 %v635
        %v674 = vpop.xlane.xlu0 %673
        %675 = vadd.xlane.f32.xlu0 %v636
        %v676 = vpop.xlane.xlu0 %675
        %677 = vadd.xlane.f32.xlu0 %v637
        %v678 = vpop.xlane.xlu0 %677
        %679 = vadd.xlane.f32.xlu0 %v638
        %v680 = vpop.xlane.xlu0 %679
        %681 = vadd.xlane.f32.xlu0 %v639
        %v682 = vpop.xlane.xlu0 %681
        %683 = vadd.xlane.f32.xlu0 %v640
        %v684 = vpop.xlane.xlu0 %683
        %685 = vadd.xlane.f32.xlu0 %v641
        %v686 = vpop.xlane.xlu0 %685
        %687 = vadd.xlane.f32.xlu0 %v642
        %v688 = vpop.xlane.xlu0 %687
        %689 = vadd.xlane.f32.xlu0 %v643
        %v690 = vpop.xlane.xlu0 %689
        %691 = vadd.xlane.f32.xlu0 %v644
        %v692 = vpop.xlane.xlu0 %691
        %693 = vadd.xlane.f32.xlu0 %v645
        %v694 = vpop.xlane.xlu0 %693
        %695 = vadd.xlane.f32.xlu0 %v646
        %v696 = vpop.xlane.xlu0 %695
        %697 = vadd.xlane.f32.xlu0 %v647
        %v698 = vpop.xlane.xlu0 %697
        %699 = vadd.xlane.f32.xlu0 %v648
        %v700 = vpop.xlane.xlu0 %699
        %701 = vadd.xlane.f32.xlu0 %v649
        %v702 = vpop.xlane.xlu0 %701
        %703 = vadd.xlane.f32.xlu0 %v650
        %v704 = vpop.xlane.xlu0 %703
        %705 = vadd.xlane.f32.xlu0 %v651
        %v706 = vpop.xlane.xlu0 %705
        %707 = vadd.xlane.f32.xlu0 %v652
        %v708 = vpop.xlane.xlu0 %707
        %709 = vadd.xlane.f32.xlu0 %v653
        %v710 = vpop.xlane.xlu0 %709
        %711 = vadd.xlane.f32.xlu0 %v654
        %v712 = vpop.xlane.xlu0 %711
        %713 = vadd.xlane.f32.xlu0 %v655
        %v714 = vpop.xlane.xlu0 %713
        %715 = vadd.xlane.f32.xlu0 %v656
        %v716 = vpop.xlane.xlu0 %715
        %717 = vadd.xlane.f32.xlu0 %v657
        %v718 = vpop.xlane.xlu0 %717
        %719 = vadd.xlane.f32.xlu0 %v658
        %v720 = vpop.xlane.xlu0 %719
        %721 = vadd.xlane.f32.xlu0 %v659
        %v722 = vpop.xlane.xlu0 %721
        %723 = vadd.xlane.f32.xlu0 %v660
        %v724 = vpop.xlane.xlu0 %723
        %v757 = vlaneseq
        %v758 = vand.u32 %v757, 127
        %v759 = vperm.slane %v662, %v758
        %v760 = vadd.s32 %v758, 4294967288
        %v761 = vperm.slane %v664, %v760
        %vm762 = vcmask 130112
        %v763 = vsel %vm762, %v761, %v759
        %v764 = vadd.s32 %v758, 4294967280
        %v765 = vperm.slane %v666, %v764
        %vm766 = vcmask 195712
        %v767 = vsel %vm766, %v765, %v763
        %v768 = vadd.s32 %v758, 4294967272
        %v769 = vperm.slane %v668, %v768
        %vm770 = vcmask 261312
        %v771 = vsel %vm770, %v769, %v767
        %v772 = vperm.slane %v670, %v758
        %v773 = vperm.slane %v672, %v760
        %v774 = vsel %vm762, %v773, %v772
        %v775 = vperm.slane %v674, %v764
        %v776 = vsel %vm766, %v775, %v774
        %v777 = vperm.slane %v676, %v768
        %v778 = vsel %vm770, %v777, %v776
        %v779 = vperm.slane %v678, %v758
        %v780 = vperm.slane %v680, %v760
        %v781 = vsel %vm762, %v780, %v779
        %v782 = vperm.slane %v682, %v764
        %v783 = vsel %vm766, %v782, %v781
        %v784 = vperm.slane %v684, %v768
        %v785 = vsel %vm770, %v784, %v783
        %v786 = vperm.slane %v686, %v758
        %v787 = vperm.slane %v688, %v760
        %v788 = vsel %vm762, %v787, %v786
        %v789 = vperm.slane %v690, %v764
        %v790 = vsel %vm766, %v789, %v788
        %v791 = vperm.slane %v692, %v768
        %v792 = vsel %vm770, %v791, %v790
        %v793 = vperm.slane %v694, %v758
        %v794 = vperm.slane %v696, %v760
        %v795 = vsel %vm762, %v794, %v793
        %v796 = vperm.slane %v698, %v764
        %v797 = vsel %vm766, %v796, %v795
        %v798 = vperm.slane %v700, %v768
        %v799 = vsel %vm770, %v798, %v797
        %v800 = vperm.slane %v702, %v758
        %v801 = vperm.slane %v704, %v760
        %v802 = vsel %vm762, %v801, %v800
        %v803 = vperm.slane %v706, %v764
        %v804 = vsel %vm766, %v803, %v802
        %v805 = vperm.slane %v708, %v768
        %v806 = vsel %vm770, %v805, %v804
        %v807 = vperm.slane %v710, %v758
        %v808 = vperm.slane %v712, %v760
        %v809 = vsel %vm762, %v808, %v807
        %v810 = vperm.slane %v714, %v764
        %v811 = vsel %vm766, %v810, %v809
        %v812 = vperm.slane %v716, %v768
        %v813 = vsel %vm770, %v812, %v811
        %v814 = vperm.slane %v718, %v758
        %v815 = vperm.slane %v720, %v760
        %v816 = vsel %vm762, %v815, %v814
        %v817 = vperm.slane %v722, %v764
        %v818 = vsel %vm766, %v817, %v816
        %v819 = vperm.slane %v724, %v768
        %v820 = vsel %vm770, %v819, %v818
        %vm821 = vcmask 1041409
        %v822 = vsel %vm821, %v778, %v771
        %vm823 = vcmask 1042434
        %v824 = vsel %vm823, %v785, %v822
        %vm825 = vcmask 1043459
        %v826 = vsel %vm825, %v792, %v824
        %vm827 = vcmask 1044484
        %v828 = vsel %vm827, %v799, %v826
        %vm829 = vcmask 1045509
        %v830 = vsel %vm829, %v806, %v828
        %vm831 = vcmask 1046534
        %v832 = vsel %vm831, %v813, %v830
        %vm833 = vcmask 1047559
        %v834 = vsel %vm833, %v820, %v832
        %v836 = vadd.f32 %v532, %v834
        %vm837 = vcmask 261120
        %838 = vst.msk [vmem:[#allocation2] sm:$0xff] %vm837, %v836
        %p839 = scmp.eq.s32.totalorder %s21, 2
        // Predicated region
        $region127: #{extend_head_forward.1} parent=113 // pred_check
          %p840 = pneg %p839
        $region128: #{extend_head_forward.1} parent=113 // pred_check_branch
          %842 = sbr.rel (%p840) target = $region130
        $region129: #{extend_head_forward.1} parent=113 // pred_region
          %v843 = vld [vmem:[%s3] sm:$0xff]
          %v844 = vld [vmem:[%s3 + $0x8] sm:$0xff]
          %v845 = vld [vmem:[%s3 + $0x10] sm:$0xff]
          %v846 = vld [vmem:[%s3 + $0x18] sm:$0xff]
          %v847 = vld [vmem:[%s3 + $0x20] sm:$0xff]
          %v848 = vld [vmem:[%s3 + $0x28] sm:$0xff]
          %v849 = vld [vmem:[%s3 + $0x30] sm:$0xff]
          %v850 = vld [vmem:[%s3 + $0x38] sm:$0xff]
          %v851 = vld [vmem:[%s3 + $0x40] sm:$0xff]
          %v852 = vld [vmem:[%s3 + $0x48] sm:$0xff]
          %v853 = vld [vmem:[%s3 + $0x50] sm:$0xff]
          %v854 = vld [vmem:[%s3 + $0x58] sm:$0xff]
          %v855 = vld [vmem:[%s3 + $0x60] sm:$0xff]
          %v856 = vld [vmem:[%s3 + $0x68] sm:$0xff]
          %v857 = vld [vmem:[%s3 + $0x70] sm:$0xff]
          %v858 = vld [vmem:[%s3 + $0x78] sm:$0xff]
          %v859 = vld [vmem:[%s3 + $0x80] sm:$0xff]
          %v860 = vld [vmem:[%s3 + $0x88] sm:$0xff]
          %v861 = vld [vmem:[%s3 + $0x90] sm:$0xff]
          %v862 = vld [vmem:[%s3 + $0x98] sm:$0xff]
          %v863 = vld [vmem:[%s3 + $0xa0] sm:$0xff]
          %v864 = vld [vmem:[%s3 + $0xa8] sm:$0xff]
          %v865 = vld [vmem:[%s3 + $0xb0] sm:$0xff]
          %v866 = vld [vmem:[%s3 + $0xb8] sm:$0xff]
          %v867 = vld [vmem:[%s4] sm:$0x1]
          %v868 = vld [vmem:[%s4 + $0x1] sm:$0x1]
          %v869 = vld [vmem:[%s4 + $0x2] sm:$0x1]
          %v870 = vld [vmem:[%s4 + $0x3] sm:$0x1]
          %v871 = vld [vmem:[%s4 + $0x4] sm:$0x1]
          %v872 = vld [vmem:[#allocation2] sm:$0xff]
          %v873 = vperm.slane %v867, 0
          %v875 = vsel %vm837, %v872, 0
          %877 = vmatpush.msra.mxu0 0.0
          %878 = vmatpush.msra.mxu0 0.0
          %879 = vmatpush.msra.mxu0 0.0
          %880 = vmatpush.msra.mxu0 0.0
          %881 = vmatpush.msra.mxu0 0.0
          %882 = vmatpush.msra.mxu0 0.0
          %883 = vmatpush.msra.mxu0 0.0
          %884 = vmatpush.msra.mxu0 0.0
          %885 = vmatpush.msra.mxu0 0.0
          %886 = vmatpush.msra.mxu0 0.0
          %887 = vmatpush.msra.mxu0 0.0
          %888 = vmatpush.msra.mxu0 0.0
          %889 = vmatpush.msra.mxu0 %v846
          %890 = vmatpush.msra.mxu0 %v845
          %891 = vmatpush.msra.mxu0 %v844
          %892 = vmatpush.msra.mxu0 %v843
          %893 = vmatmul.f32.gmra.mxu0 %v875
          %v894 = vpop.f32.mrf.mxu0
          %v895 = vadd.f32 %v873, %v894
          %896 = vdwg.mxu0
          %v897 = vmax.f32 %v895, 0.0
          %v898 = vperm.slane %v868, 0
          %vm899 = vcmask 523264
          %v901 = vsel %vm899, %v897, 0
          %903 = vmatpush.msra.mxu0 0.0
          %904 = vmatpush.msra.mxu0 0.0
          %905 = vmatpush.msra.mxu0 0.0
          %906 = vmatpush.msra.mxu0 0.0
          %907 = vmatpush.msra.mxu0 0.0
          %908 = vmatpush.msra.mxu0 0.0
          %909 = vmatpush.msra.mxu0 0.0
          %910 = vmatpush.msra.mxu0 0.0
          %911 = vmatpush.msra.mxu0 %v854
          %912 = vmatpush.msra.mxu0 %v853
          %913 = vmatpush.msra.mxu0 %v852
          %914 = vmatpush.msra.mxu0 %v851
          %915 = vmatpush.msra.mxu0 %v850
          %916 = vmatpush.msra.mxu0 %v849
          %917 = vmatpush.msra.mxu0 %v848
          %918 = vmatpush.msra.mxu0 %v847
          %919 = vmatmul.f32.gmra.mxu0 %v901
          %v920 = vpop.f32.mrf.mxu0
          %v921 = vadd.f32 %v898, %v920
          %922 = vdwg.mxu0
          %v923 = vld [vmem:[%s520] sm:$0xff]
          %v924 = vld [vmem:[%s520 + $0x8] sm:$0xff]
          %v925 = vld [vmem:[%s520 + $0x10] sm:$0xff]
          %v926 = vld [vmem:[%s520 + $0x18] sm:$0xff]
          %v927 = vld [vmem:[%s520 + $0x20] sm:$0xff]
          %v928 = vld [vmem:[%s520 + $0x28] sm:$0xff]
          %v929 = vld [vmem:[%s520 + $0x30] sm:$0xff]
          %v930 = vld [vmem:[%s520 + $0x38] sm:$0xff]
          %v932 = vsel %vm837, %v923, 0
          %v935 = vsel %vm837, %v924, 0
          %v938 = vsel %vm837, %v925, 0
          %v941 = vsel %vm837, %v926, 0
          %v944 = vsel %vm837, %v927, 0
          %v947 = vsel %vm837, %v928, 0
          %v950 = vsel %vm837, %v929, 0
          %v953 = vsel %vm837, %v930, 0
          %955 = vmatpush.msra.mxu0 0.0
          %956 = vmatpush.msra.mxu0 0.0
          %957 = vmatpush.msra.mxu0 0.0
          %958 = vmatpush.msra.mxu0 0.0
          %959 = vmatpush.msra.mxu0 0.0
          %960 = vmatpush.msra.mxu0 0.0
          %961 = vmatpush.msra.mxu0 0.0
          %962 = vmatpush.msra.mxu0 0.0
          %963 = vmatpush.msra.mxu0 0.0
          %964 = vmatpush.msra.mxu0 0.0
          %965 = vmatpush.msra.mxu0 0.0
          %966 = vmatpush.msra.mxu0 0.0
          %967 = vmatpush.msra.mxu0 %v858
          %968 = vmatpush.msra.mxu0 %v857
          %969 = vmatpush.msra.mxu0 %v856
          %970 = vmatpush.msra.mxu0 %v855
          %971 = vmatmul.f32.gmra.mxu0 %v932
          %v972 = vpop.f32.mrf.mxu0
          %v973 = vadd.f32 0.0, %v972
          %974 = vmatmul.f32.gmra.mxu0 %v935
          %v975 = vpop.f32.mrf.mxu0
          %v976 = vadd.f32 0.0, %v975
          %977 = vmatmul.f32.gmra.mxu0 %v938
          %v978 = vpop.f32.mrf.mxu0
          %v979 = vadd.f32 0.0, %v978
          %980 = vmatmul.f32.gmra.mxu0 %v941
          %v981 = vpop.f32.mrf.mxu0
          %v982 = vadd.f32 0.0, %v981
          %983 = vmatmul.f32.gmra.mxu0 %v944
          %v984 = vpop.f32.mrf.mxu0
          %v985 = vadd.f32 0.0, %v984
          %986 = vmatmul.f32.gmra.mxu0 %v947
          %v987 = vpop.f32.mrf.mxu0
          %v988 = vadd.f32 0.0, %v987
          %989 = vmatmul.f32.gmra.mxu0 %v950
          %v990 = vpop.f32.mrf.mxu0
          %v991 = vadd.f32 0.0, %v990
          %992 = vmatmul.f32.gmra.mxu0 %v953
          %v993 = vpop.f32.mrf.mxu0
          %v994 = vadd.f32 0.0, %v993
          %995 = vdwg.mxu0
          %v997 = vrot.slane %v921, 1
          %v998 = vrot.slane %v921, 2
          %v999 = vrot.slane %v921, 3
          %v1000 = vrot.slane %v921, 4
          %v1001 = vrot.slane %v921, 5
          %v1002 = vrot.slane %v921, 6
          %v1003 = vrot.slane %v921, 7
          %v1004 = vperm.slane %v921, 0
          %v1005 = vperm.slane %v997, 0
          %v1006 = vperm.slane %v998, 0
          %v1007 = vperm.slane %v999, 0
          %v1008 = vperm.slane %v1000, 0
          %v1009 = vperm.slane %v1001, 0
          %v1010 = vperm.slane %v1002, 0
          %v1011 = vperm.slane %v1003, 0
          %v1020 = vadd.f32 %v973, %v1004
          %v1021 = vadd.f32 %v976, %v1005
          %v1022 = vadd.f32 %v979, %v1006
          %v1023 = vadd.f32 %v982, %v1007
          %v1024 = vadd.f32 %v985, %v1008
          %v1025 = vadd.f32 %v988, %v1009
          %v1026 = vadd.f32 %v991, %v1010
          %v1027 = vadd.f32 %v994, %v1011
          %v1028 = vmax.f32 %v1020, 0.0
          %v1029 = vmax.f32 %v1021, 0.0
          %v1030 = vmax.f32 %v1022, 0.0
          %v1031 = vmax.f32 %v1023, 0.0
          %v1032 = vmax.f32 %v1024, 0.0
          %v1033 = vmax.f32 %v1025, 0.0
          %v1034 = vmax.f32 %v1026, 0.0
          %v1035 = vmax.f32 %v1027, 0.0
          %v1037 = vsel %vm899, %v1028, 0
          %v1040 = vsel %vm899, %v1029, 0
          %v1043 = vsel %vm899, %v1030, 0
          %v1046 = vsel %vm899, %v1031, 0
          %v1049 = vsel %vm899, %v1032, 0
          %v1052 = vsel %vm899, %v1033, 0
          %v1055 = vsel %vm899, %v1034, 0
          %v1058 = vsel %vm899, %v1035, 0
          %1060 = vmatpush.msra.mxu0 0.0
          %1061 = vmatpush.msra.mxu0 0.0
          %1062 = vmatpush.msra.mxu0 0.0
          %1063 = vmatpush.msra.mxu0 0.0
          %1064 = vmatpush.msra.mxu0 0.0
          %1065 = vmatpush.msra.mxu0 0.0
          %1066 = vmatpush.msra.mxu0 0.0
          %1067 = vmatpush.msra.mxu0 0.0
          %1068 = vmatpush.msra.mxu0 %v866
          %1069 = vmatpush.msra.mxu0 %v865
          %1070 = vmatpush.msra.mxu0 %v864
          %1071 = vmatpush.msra.mxu0 %v863
          %1072 = vmatpush.msra.mxu0 %v862
          %1073 = vmatpush.msra.mxu0 %v861
          %1074 = vmatpush.msra.mxu0 %v860
          %1075 = vmatpush.msra.mxu0 %v859
          %1076 = vmatmul.f32.gmra.mxu0 %v1037
          %v1077 = vpop.f32.mrf.mxu0
          %v1078 = vadd.f32 0.0, %v1077
          %1079 = vmatmul.f32.gmra.mxu0 %v1040
          %v1080 = vpop.f32.mrf.mxu0
          %v1081 = vadd.f32 0.0, %v1080
          %1082 = vmatmul.f32.gmra.mxu0 %v1043
          %v1083 = vpop.f32.mrf.mxu0
          %v1084 = vadd.f32 0.0, %v1083
          %1085 = vmatmul.f32.gmra.mxu0 %v1046
          %v1086 = vpop.f32.mrf.mxu0
          %v1087 = vadd.f32 0.0, %v1086
          %1088 = vmatmul.f32.gmra.mxu0 %v1049
          %v1089 = vpop.f32.mrf.mxu0
          %v1090 = vadd.f32 0.0, %v1089
          %1091 = vmatmul.f32.gmra.mxu0 %v1052
          %v1092 = vpop.f32.mrf.mxu0
          %v1093 = vadd.f32 0.0, %v1092
          %1094 = vmatmul.f32.gmra.mxu0 %v1055
          %v1095 = vpop.f32.mrf.mxu0
          %v1096 = vadd.f32 0.0, %v1095
          %1097 = vmatmul.f32.gmra.mxu0 %v1058
          %v1098 = vpop.f32.mrf.mxu0
          %v1099 = vadd.f32 0.0, %v1098
          %1100 = vdwg.mxu0
          %v1101 = vperm.slane %v869, 0
          %v1102 = vadd.f32 %v1078, %v1101
          %v1103 = vadd.f32 %v1081, %v1101
          %v1104 = vadd.f32 %v1084, %v1101
          %v1105 = vadd.f32 %v1087, %v1101
          %v1106 = vadd.f32 %v1090, %v1101
          %v1107 = vadd.f32 %v1093, %v1101
          %v1108 = vadd.f32 %v1096, %v1101
          %v1109 = vadd.f32 %v1099, %v1101
          %v1110 = vmax.f32 %v1102, 0.0
          %v1111 = vmax.f32 %v1103, 0.0
          %v1112 = vmax.f32 %v1104, 0.0
          %v1113 = vmax.f32 %v1105, 0.0
          %v1114 = vmax.f32 %v1106, 0.0
          %v1115 = vmax.f32 %v1107, 0.0
          %v1116 = vmax.f32 %v1108, 0.0
          %v1117 = vmax.f32 %v1109, 0.0
          %v1118 = vperm.slane %v870, 0
          %v1119 = vmul.f32 %v1110, %v1118
          %v1120 = vmul.f32 %v1111, %v1118
          %v1121 = vmul.f32 %v1112, %v1118
          %v1122 = vmul.f32 %v1113, %v1118
          %v1123 = vmul.f32 %v1114, %v1118
          %v1124 = vmul.f32 %v1115, %v1118
          %v1125 = vmul.f32 %v1116, %v1118
          %v1126 = vmul.f32 %v1117, %v1118
          %v1127 = vsel %vm899, %v1119, 0.0
          %1128 = vadd.xlane.f32.xlu0 %v1127
          %v1129 = vpop.xlane.xlu0 %1128
          %v1130 = vsel %vm899, %v1120, 0.0
          %1131 = vadd.xlane.f32.xlu0 %v1130
          %v1132 = vpop.xlane.xlu0 %1131
          %v1133 = vsel %vm899, %v1121, 0.0
          %1134 = vadd.xlane.f32.xlu0 %v1133
          %v1135 = vpop.xlane.xlu0 %1134
          %v1136 = vsel %vm899, %v1122, 0.0
          %1137 = vadd.xlane.f32.xlu0 %v1136
          %v1138 = vpop.xlane.xlu0 %1137
          %v1139 = vsel %vm899, %v1123, 0.0
          %1140 = vadd.xlane.f32.xlu0 %v1139
          %v1141 = vpop.xlane.xlu0 %1140
          %v1142 = vsel %vm899, %v1124, 0.0
          %1143 = vadd.xlane.f32.xlu0 %v1142
          %v1144 = vpop.xlane.xlu0 %1143
          %v1145 = vsel %vm899, %v1125, 0.0
          %1146 = vadd.xlane.f32.xlu0 %v1145
          %v1147 = vpop.xlane.xlu0 %1146
          %v1148 = vsel %vm899, %v1126, 0.0
          %1149 = vadd.xlane.f32.xlu0 %v1148
          %v1150 = vpop.xlane.xlu0 %1149
          %s1152 = vtos %v871
          %v1153 = vstv %s1152
          %v1155 = vadd.f32 %v1129, %v1153
          %v1156 = vadd.f32 %v1132, %v1153
          %v1157 = vadd.f32 %v1135, %v1153
          %v1158 = vadd.f32 %v1138, %v1153
          %v1159 = vadd.f32 %v1141, %v1153
          %v1160 = vadd.f32 %v1144, %v1153
          %v1161 = vadd.f32 %v1147, %v1153
          %v1162 = vadd.f32 %v1150, %v1153
          %v1171 = vperm.slane %v1155, %v758
          %v1172 = vperm.slane %v1156, %v758
          %v1173 = vperm.slane %v1157, %v758
          %v1174 = vperm.slane %v1158, %v758
          %v1175 = vperm.slane %v1159, %v758
          %v1176 = vperm.slane %v1160, %v758
          %v1177 = vperm.slane %v1161, %v758
          %v1178 = vperm.slane %v1162, %v758
          %v1179 = vsel %vm821, %v1172, %v1171
          %v1180 = vsel %vm823, %v1173, %v1179
          %v1181 = vsel %vm825, %v1174, %v1180
          %v1182 = vsel %vm827, %v1175, %v1181
          %v1183 = vsel %vm829, %v1176, %v1182
          %v1184 = vsel %vm831, %v1177, %v1183
          %v1185 = vsel %vm833, %v1178, %v1184
          %vm1187 = vcmask 64512
          %1188 = vst.msk [vmem:[%s525] sm:$0xff] %vm1187, %v1185
        $region130: #{extend_head_forward.1} parent=113 // pred_fallthru
          _
        %p1189 = scmp.lt.s32.totalorder %s20, 1
        %s1190 = scalar_select %p1189, %s20, 1
        %s1191 = smul.addr %s1190, 8
        %s1192 = scalar_lea.vmem %s5, %s1191
        // Predicated region
        $region131: #{extend_head_forward.1} parent=113 // pred_check
          %p1193 = pneg %p170
        $region132: #{extend_head_forward.1} parent=113 // pred_check_branch
          %1195 = sbr.rel (%p1193) target = $region134
        $region133: #{extend_head_forward.1} parent=113 // pred_region
          _
        $region134: #{extend_head_forward.1} parent=113 // pred_fallthru
          _
      $region114: #{extend_head_forward.1} parent=5 // pred_fallthru
        _
      %p1196 = scmp.le.s32.totalorder 2, %s11
      // Predicated region
      $region135: #{extend_head_forward.1} parent=5 // pred_check
        %p1197 = pneg %p1196
      $region136: #{extend_head_forward.1} parent=5 // pred_check_branch
        %1199 = sbr.rel (%p1197) target = $region138
      $region137: #{extend_head_forward.1} parent=5 // pred_region
        %s1200 = ssub.s32 %s11, 2
        // Predicated region
        $region139: #{extend_head_forward.1} parent=137 // pred_check
          %p1201 = pneg %p176
        $region140: #{extend_head_forward.1} parent=137 // pred_check_branch
          %1203 = sbr.rel (%p1201) target = $region142
        $region141: #{extend_head_forward.1} parent=137 // pred_region
          %p1204 = scmp.lt.s32.totalorder %s22, 1
          %s1205 = scalar_select %p1204, %s22, 1
          %s1206 = smul.addr %s1205, 8
          %s1207 = scalar_lea.vmem %s5, %s1206
        $region142: #{extend_head_forward.1} parent=137 // pred_fallthru
          _
      $region138: #{extend_head_forward.1} parent=5 // pred_fallthru
        _
    $region6: #{extend_head_forward.1} parent=1 // loop_footer
      %s15 = sadd.s32 1, %s11
    $region7: #{extend_head_forward.1} parent=1 // loop_footer_branch
      %10 = sbr.rel target = $region3
    $region8: #{extend_head_forward.1} parent=1 // loop_exit
      _

</llo_original>
